<compile_context>
chip_gen: v6e
topology: v6e:2x2x1
jax: 0.10.0
libtpu: 0.0.40
codegen_flags: <defaults>
</compile_context>

<pallas_src>
import math
from functools import partial

import jax
import jax.numpy as jnp
from jax.experimental import pallas as pl
from jax.experimental.pallas import tpu as pltpu


# ----------------------------------------------------------------------------
# Kernel 1: GRU cell + attention + concat layer (small, runs once per token)
# ----------------------------------------------------------------------------
def gru_attn_concat_kernel(
    emb_ref, h_ref, enc_ref, topic_ref,
    w_ir_ref, w_iz_ref, w_in_ref, w_hr_ref, w_hz_ref, w_hn_ref,
    b_r_ref, b_z_ref, b_in_ref, b_hn_ref,
    w_topic_ref, b_topic_ref,
    wc_h_ref, wc_ctx_ref, wc_top_ref, b_cat_ref,
    concat_ref, hid_ref, attn_ref,
):
    f32 = jnp.float32
    x = emb_ref[...]          # (B, E)   embedded input token
    h = h_ref[...]            # (B, H)   previous hidden state (layer 0)
    enc = enc_ref[...]        # (B, S, H) encoder outputs, batch-major
    topic = topic_ref[...]    # (B, T)

    # ---- GRU cell (PyTorch nn.GRU semantics, gate order r|z|n) ----
    r = jax.nn.sigmoid(jnp.dot(x, w_ir_ref[...], preferred_element_type=f32)
                       + jnp.dot(h, w_hr_ref[...], preferred_element_type=f32)
                       + b_r_ref[...])
    z = jax.nn.sigmoid(jnp.dot(x, w_iz_ref[...], preferred_element_type=f32)
                       + jnp.dot(h, w_hz_ref[...], preferred_element_type=f32)
                       + b_z_ref[...])
    n = jnp.tanh(jnp.dot(x, w_in_ref[...], preferred_element_type=f32) + b_in_ref[...]
                 + r * (jnp.dot(h, w_hn_ref[...], preferred_element_type=f32)
                        + b_hn_ref[...]))
    h_new = (1.0 - z) * n + z * h                                   # (B, H)

    # ---- Luong 'dot' attention; both contractions on the MXU, exact softmax ----
    hq = h_new[:, None, :]                                          # (B, 1, H)
    scores = jnp.einsum('bqh,bsh->bqs', hq, enc,
                        preferred_element_type=f32)                 # (B, 1, S)
    scores = scores - jnp.max(scores, axis=-1, keepdims=True)
    e = jnp.exp(scores)
    attn_w = e / jnp.sum(e, axis=-1, keepdims=True)                 # (B, 1, S)
    context = jnp.einsum('bqs,bsh->bqh', attn_w, enc,
                         preferred_element_type=f32)[:, 0, :]       # (B, H)

    # ---- topic transform ----
    topic_out = (jnp.dot(topic, w_topic_ref[...], preferred_element_type=f32)
                 + b_topic_ref[...])                                # (B, H)

    # ---- concat Linear(3H -> H) as three H x H blocks + tanh ----
    cat_pre = (jnp.dot(h_new, wc_h_ref[...], preferred_element_type=f32)
               + jnp.dot(context, wc_ctx_ref[...], preferred_element_type=f32)
               + jnp.dot(topic_out, wc_top_ref[...], preferred_element_type=f32)
               + b_cat_ref[...])
    concat_ref[...] = jnp.tanh(cat_pre).astype(concat_ref.dtype)
    hid_ref[...] = h_new
    attn_ref[...] = attn_w


# ----------------------------------------------------------------------------
# Kernel 2: vocabulary projection (dominant, streamed over a parallel grid)
# ----------------------------------------------------------------------------
def vocab_proj_kernel(c_ref, w_ref, b_ref, out_ref):
    out_ref[...] = (jnp.dot(c_ref[...], w_ref[...],
                            preferred_element_type=jnp.float32)
                    + b_ref[...])


# ----------------------------------------------------------------------------
# One-time parameter / input preparation (NOT per decode step)
# ----------------------------------------------------------------------------
def make_params(key, vocab, emb_dim, hidden, num_topic):
    """Raw parameters in PyTorch layouts (as nn.GRU / nn.Linear store them)."""
    ks = jax.random.split(key, 11)

    def u(k, shape, scale):
        return jax.random.uniform(k, shape, jnp.float32, -scale, scale)

    sH = 1.0 / math.sqrt(hidden)
    sT = 1.0 / math.sqrt(num_topic)
    s3H = 1.0 / math.sqrt(3 * hidden)
    return dict(
        embedding=jax.random.normal(ks[0], (vocab, emb_dim), jnp.float32),
        w_ih=u(ks[1], (3 * hidden, emb_dim), sH),   # GRU weight_ih_l0, gates [r|z|n]
        w_hh=u(ks[2], (3 * hidden, hidden), sH),    # GRU weight_hh_l0
        b_ih=u(ks[3], (3 * hidden,), sH),
        b_hh=u(ks[4], (3 * hidden,), sH),
        w_topic=u(ks[5], (hidden, num_topic), sT),  # Linear(num_topic, hidden)
        b_topic=u(ks[6], (hidden,), sT),
        w_concat=u(ks[7], (hidden, 3 * hidden), s3H),  # Linear(3H, H)
        b_concat=u(ks[8], (hidden,), s3H),
        w_out=u(ks[9], (vocab, hidden), sH),        # Linear(H, vocab)
        b_out=u(ks[10], (vocab,), sH),
    )


def _pick_vocab_tile(hidden, vocab, itemsize, budget_bytes):
    """Largest 128-multiple vocab tile whose double-buffered w_out footprint
    fits the per-generation VMEM budget (v7x 64 MiB is the tight case)."""
    v128 = ((vocab + 127) // 128) * 128
    tile = 128
    for cand in (4096, 2048, 1024, 512, 256, 128):
        if 2 * hidden * cand * itemsize <= budget_bytes:
            tile = cand
            break
    return min(tile, v128)


def prepare_params(raw, vocab_weight_dtype=jnp.bfloat16,
                   w_out_tile_budget_bytes=24 * 1024 * 1024):
    """One-time weight prep: per-gate GRU splits, transposes, bias fusion,
    contiguous pre-tiled + zero-padded bf16 w_out slabs."""
    f32 = jnp.float32
    H = raw["w_hh"].shape[1]
    V = raw["w_out"].shape[0]
    w_ih = raw["w_ih"].astype(f32)          # (3H, E), gates r|z|n
    w_hh = raw["w_hh"].astype(f32)          # (3H, H)
    b_ih = raw["b_ih"].astype(f32)
    b_hh = raw["b_hh"].astype(f32)
    w_cat = raw["w_concat"].astype(f32)     # (H, 3H) == (out, in)

    itemsize = jnp.dtype(vocab_weight_dtype).itemsize
    tile_v = _pick_vocab_tile(H, V, itemsize, w_out_tile_budget_bytes)
    v_pad = ((V + tile_v - 1) // tile_v) * tile_v
    n_tiles = v_pad // tile_v

    w_out = jnp.pad(raw["w_out"].astype(f32).T, ((0, 0), (0, v_pad - V)))  # (H, Vp)
    w_out_tiles = (w_out.reshape(H, n_tiles, tile_v)
                        .transpose(1, 0, 2)
                        .astype(vocab_weight_dtype))                       # (NT, H, Tv) contiguous slabs
    b_out = jnp.pad(raw["b_out"].astype(f32), (0, v_pad - V))[None]        # (1, Vp)

    return dict(
        embedding=raw["embedding"].astype(f32),
        # per-gate GRU weights: gate boundaries stay out of the kernel, so no
        # lane-crossing slices regardless of H.
        w_ir=w_ih[0:H].T, w_iz=w_ih[H:2 * H].T, w_in=w_ih[2 * H:3 * H].T,   # (E, H)
        w_hr=w_hh[0:H].T, w_hz=w_hh[H:2 * H].T, w_hn=w_hh[2 * H:3 * H].T,   # (H, H)
        b_r=(b_ih[0:H] + b_hh[0:H])[None],                # r/z biases pre-summed
        b_z=(b_ih[H:2 * H] + b_hh[H:2 * H])[None],
        b_in=b_ih[2 * H:3 * H][None],
        b_hn=b_hh[2 * H:3 * H][None],                     # stays inside r * (...)
        w_topic=raw["w_topic"].astype(f32).T,             # (T, H)
        b_topic=raw["b_topic"].astype(f32)[None],         # (1, H)
        wc_h=w_cat[:, 0:H].T,                             # (H, H)
        wc_ctx=w_cat[:, H:2 * H].T,
        wc_top=w_cat[:, 2 * H:3 * H].T,
        b_cat=raw["b_concat"].astype(f32)[None],          # (1, H)
        w_out_tiles=w_out_tiles,                          # (NT, H, Tv) bf16
        b_out=b_out,                                      # (1, Vp)
    )


def prepare_encoder_outputs(encoder_outputs_sbh):
    """(S, B, H) -> (B, S, H): done ONCE per decode sequence, not per token."""
    return jnp.transpose(encoder_outputs_sbh, (1, 0, 2)).astype(jnp.float32)


# ----------------------------------------------------------------------------
# Per-decode-step forward
# ----------------------------------------------------------------------------
@partial(jax.jit, static_argnames=("vocab_size",))
def attn_decoder_forward(prepared, input_seq, last_hidden, target_topic, enc_bsh,
                         *, vocab_size):
    """
    input_seq:    (B,)       int32 token ids (one decode step)
    last_hidden:  (1, B, H)  previous GRU hidden state (n_layers = 1)
    target_topic: (B, T)
    enc_bsh:      (B, S, H)  encoder outputs, batch-major (prepare_encoder_outputs)
    returns (output (B, V) logits, hidden (1, B, H), attn_weights (B, 1, S))
    """
    B = input_seq.shape[0]
    H = last_hidden.shape[-1]
    S = enc_bsh.shape[1]
    w_out_tiles = prepared["w_out_tiles"]
    n_tiles, _, tile_v = w_out_tiles.shape
    v_pad = n_tiles * tile_v
    w_dtype = w_out_tiles.dtype

    # glue: frozen-embedding gather + dropout(p=0) identity
    embedded = prepared["embedding"][input_seq]        # (B, E) f32
    h0 = last_hidden[0].astype(jnp.float32)            # (B, H)
    topic = target_topic.astype(jnp.float32)           # (B, T)
    enc = enc_bsh.astype(jnp.float32)                  # (B, S, H)

    # pad batch to a sublane multiple: unmasked lane-dense stores in the vocab loop
    B_pad = ((B + 7) // 8) * 8
    if B_pad != B:
        pad2 = ((0, B_pad - B), (0, 0))
        embedded = jnp.pad(embedded, pad2)
        h0 = jnp.pad(h0, pad2)
        topic = jnp.pad(topic, pad2)
        enc = jnp.pad(enc, ((0, B_pad - B), (0, 0), (0, 0)))

    # ---- small fused GRU + attention + concat kernel (everything VMEM-resident) ----
    concat_bf, h_new, attn_w = pl.pallas_call(
        gru_attn_concat_kernel,
        out_shape=(
            jax.ShapeDtypeStruct((B_pad, H), w_dtype),      # concat_out, fed to vocab proj
            jax.ShapeDtypeStruct((B_pad, H), jnp.float32),  # new hidden
            jax.ShapeDtypeStruct((B_pad, 1, S), jnp.float32),
        ),
    )(embedded, h0, enc, topic,
      prepared["w_ir"], prepared["w_iz"], prepared["w_in"],
      prepared["w_hr"], prepared["w_hz"], prepared["w_hn"],
      prepared["b_r"], prepared["b_z"], prepared["b_in"], prepared["b_hn"],
      prepared["w_topic"], prepared["b_topic"],
      prepared["wc_h"], prepared["wc_ctx"], prepared["wc_top"], prepared["b_cat"])

    # ---- vocab projection: contiguous bf16 slabs streamed over a parallel grid ----
    itemsize = jnp.dtype(w_dtype).itemsize
    cost = pl.CostEstimate(
        flops=2 * B_pad * H * v_pad,
        transcendentals=0,
        bytes_accessed=(H * v_pad * itemsize + B_pad * v_pad * 4
                        + v_pad * 4 + B_pad * H * itemsize),
    )
    logits_pad = pl.pallas_call(
        vocab_proj_kernel,
        grid=(n_tiles,),
        in_specs=[
            pl.BlockSpec((B_pad, H), lambda i: (0, 0)),            # concat_out (tiny, resident)
            pl.BlockSpec((None, H, tile_v), lambda i: (i, 0, 0)),  # contiguous w_out slab per tile
            pl.BlockSpec((1, tile_v), lambda i: (0, i)),           # bias tile
        ],
        out_specs=pl.BlockSpec((B_pad, tile_v), lambda i: (0, i)), # lane-dense logits tile
        out_shape=jax.ShapeDtypeStruct((B_pad, v_pad), jnp.float32),
        compiler_params=pltpu.CompilerParams(
            # Vocab tiles are independent -> parallel (shardable across the two
            # v7x TensorCores); no accumulator carried across the grid.
            dimension_semantics=("parallel",),
            # Double-buffered w_out slabs are budgeted <= 24 MiB in prepare_params,
            # so 48 MiB scoped VMEM is safe on v7x (64 MiB) and ample on v5e/v6e.
            vmem_limit_bytes=48 * 1024 * 1024,
        ),
        cost_estimate=cost,
    )(concat_bf, w_out_tiles, prepared["b_out"])

    output = logits_pad[:B, :vocab_size]   # raw logits, as in the PyTorch module
    hidden = h_new[:B][None]               # (1, B, H)
    attn_weights = attn_w[:B]              # (B, 1, S)
    return output, hidden, attn_weights


# ----------------------------------------------------------------------------
# Pure-JAX reference (matches the PyTorch module; 'dot' attention, n_layers=1)
# ----------------------------------------------------------------------------
def reference_forward(raw, input_seq, last_hidden, target_topic, enc_sbh):
    H = raw["w_hh"].shape[1]
    emb = raw["embedding"][input_seq]
    h = last_hidden[0]
    gi = emb @ raw["w_ih"].T + raw["b_ih"]
    gh = h @ raw["w_hh"].T + raw["b_hh"]
    r = jax.nn.sigmoid(gi[:, :H] + gh[:, :H])
    z = jax.nn.sigmoid(gi[:, H:2 * H] + gh[:, H:2 * H])
    n = jnp.tanh(gi[:, 2 * H:] + r * gh[:, 2 * H:])
    h_new = (1.0 - z) * n + z * h
    enc = jnp.transpose(enc_sbh, (1, 0, 2))                       # (B, S, H)
    scores = jnp.einsum('bh,bsh->bs', h_new, enc)
    attn = jax.nn.softmax(scores, axis=-1)[:, None, :]            # (B, 1, S)
    ctx = jnp.einsum('bqs,bsh->bqh', attn, enc)[:, 0]
    topic_out = target_topic @ raw["w_topic"].T + raw["b_topic"]
    cat = jnp.concatenate([h_new, ctx, topic_out], axis=1)
    concat_out = jnp.tanh(cat @ raw["w_concat"].T + raw["b_concat"])
    out = concat_out @ raw["w_out"].T + raw["b_out"]
    return out, h_new[None], attn


# ----------------------------------------------------------------------------
if __name__ == "__main__":
    # small shapes consistent with the module's forward
    B, H, E, V, T, S = 2, 32, 16, 50, 10, 8   # batch, hidden, emb, vocab, topics, src len

    key = jax.random.PRNGKey(0)
    kp, k1, k2, k3, k4 = jax.random.split(key, 5)

    raw_params = make_params(kp, vocab=V, emb_dim=E, hidden=H, num_topic=T)
    params = prepare_params(raw_params)            # one-time weight prep

    input_seq = jax.random.randint(k1, (B,), 0, V, dtype=jnp.int32)     # 1 x B step
    last_hidden = jax.random.normal(k2, (1, B, H), jnp.float32)         # n_layers=1
    target_topic = jax.random.normal(k3, (B, T), jnp.float32)
    encoder_outputs = jax.random.normal(k4, (S, B, H), jnp.float32)     # (S, B, H)

    enc_bsh = prepare_encoder_outputs(encoder_outputs)  # once per decode sequence

    output, hidden, attn_weights = attn_decoder_forward(
        params, input_seq, last_hidden, target_topic, enc_bsh, vocab_size=V)
    jax.block_until_ready((output, hidden, attn_weights))

    assert output.shape == (B, V)
    assert hidden.shape == (1, B, H)
    assert attn_weights.shape == (B, 1, S)

    # tolerance check against the pure-JAX reference
    ref_out, ref_hid, ref_attn = reference_forward(
        raw_params, input_seq, last_hidden, target_topic, encoder_outputs)
    assert jnp.allclose(hidden, ref_hid, atol=1e-4, rtol=1e-4)
    assert jnp.allclose(attn_weights, ref_attn, atol=1e-4, rtol=1e-4)
    # logits pass through bf16 concat_out x bf16 w_out -> bf16-level tolerance
    assert jnp.allclose(output, ref_out, atol=5e-2, rtol=5e-2)
    print("KERNEL_OK")
</pallas_src>

<mosaic_0001>
module attributes {stable_mosaic.version = 11 : i64} {
  func.func @vocab_proj_kernel(%arg0: i32, %arg1: memref<8x32xbf16, #tpu.memory_space<vmem>>, %arg2: memref<1x32x128xbf16, #tpu.memory_space<vmem>>, %arg3: memref<1x128xf32, #tpu.memory_space<vmem>>, %arg4: memref<8x128xf32, #tpu.memory_space<vmem>>) attributes {dimension_semantics = [#tpu.dimension_semantics<parallel>], iteration_bounds = array<i64: 1>, scalar_prefetch = 0 : i64, scratch_operands = 0 : i64, tpu.core_type = #tpu.core_type<tc>, window_params = [{pipeline_mode = #tpu.pipeline_mode<synchronous>, transform_indices = @transform_0, window_bounds = array<i64: 8, 32>}, {transform_indices = @transform_1, window_bounds = array<i64: 1, 32, 128>}, {transform_indices = @transform_2, window_bounds = array<i64: 1, 128>}, {transform_indices = @transform_3, window_bounds = array<i64: 8, 128>}]} {
    %c0 = arith.constant 0 : index
    %c0_0 = arith.constant 0 : index
    %0 = vector.load %arg1[%c0, %c0_0] : memref<8x32xbf16, #tpu.memory_space<vmem>>, vector<8x32xbf16>
    %c0_1 = arith.constant 0 : index
    %c0_2 = arith.constant 0 : index
    %c0_3 = arith.constant 0 : index
    %1 = vector.load %arg2[%c0_1, %c0_2, %c0_3] : memref<1x32x128xbf16, #tpu.memory_space<vmem>>, vector<1x32x128xbf16>
    %2 = vector.shape_cast %1 : vector<1x32x128xbf16> to vector<32x128xbf16>
    %cst = arith.constant dense<0.000000e+00> : vector<8x128xf32>
    %3 = tpu.matmul %0, %2, %cst {dimension_numbers = #tpu.dot_dimension_numbers<[1], [0], [0], [1], [0, 0, 1, 1], [], []>} : vector<8x32xbf16>, vector<32x128xbf16>, vector<8x128xf32> -> vector<8x128xf32>
    %c0_4 = arith.constant 0 : index
    %c0_5 = arith.constant 0 : index
    %4 = vector.load %arg3[%c0_4, %c0_5] : memref<1x128xf32, #tpu.memory_space<vmem>>, vector<1x128xf32>
    %5 = vector.broadcast %4 : vector<1x128xf32> to vector<8x128xf32>
    %6 = arith.addf %3, %5 : vector<8x128xf32>
    %c0_6 = arith.constant 0 : index
    %c0_7 = arith.constant 0 : index
    %7 = vector.load %arg4[%c0_6, %c0_7] : memref<8x128xf32, #tpu.memory_space<vmem>>, vector<8x128xf32>
    tpu.vector_store %arg4[%c0_6, %c0_7], %6 {strides = array<i32>} : memref<8x128xf32, #tpu.memory_space<vmem>>, vector<8x128xf32>,
    return
  }
  func.func @transform_0(%arg0: i32) -> (i32, i32) {
    %c0_i32 = arith.constant 0 : i32
    %c0_i32_0 = arith.constant 0 : i32
    %c0_i32_1 = arith.constant 0 : i32
    return %c0_i32, %c0_i32_0 : i32, i32
  }
  func.func @transform_1(%arg0: i32) -> (i32, i32, i32) {
    %c0_i32 = arith.constant 0 : i32
    %c0_i32_0 = arith.constant 0 : i32
    %c0_i32_1 = arith.constant 0 : i32
    return %arg0, %c0_i32, %c0_i32_0 : i32, i32, i32
  }
  func.func @transform_2(%arg0: i32) -> (i32, i32) {
    %c0_i32 = arith.constant 0 : i32
    %c0_i32_0 = arith.constant 0 : i32
    return %c0_i32, %arg0 : i32, i32
  }
  func.func @transform_3(%arg0: i32) -> (i32, i32) {
    %c0_i32 = arith.constant 0 : i32
    %c0_i32_0 = arith.constant 0 : i32
    return %c0_i32, %arg0 : i32, i32
  }
}

module attributes {stable_mosaic.version = 11 : i64} {
  func.func @gru_attn_concat_kernel(%arg0: memref<8x16xf32, #tpu.memory_space<vmem>>, %arg1: memref<8x32xf32, #tpu.memory_space<vmem>>, %arg2: memref<8x8x32xf32, #tpu.memory_space<vmem>>, %arg3: memref<8x10xf32, #tpu.memory_space<vmem>>, %arg4: memref<16x32xf32, #tpu.memory_space<vmem>>, %arg5: memref<16x32xf32, #tpu.memory_space<vmem>>, %arg6: memref<16x32xf32, #tpu.memory_space<vmem>>, %arg7: memref<32x32xf32, #tpu.memory_space<vmem>>, %arg8: memref<32x32xf32, #tpu.memory_space<vmem>>, %arg9: memref<32x32xf32, #tpu.memory_space<vmem>>, %arg10: memref<1x32xf32, #tpu.memory_space<vmem>>, %arg11: memref<1x32xf32, #tpu.memory_space<vmem>>, %arg12: memref<1x32xf32, #tpu.memory_space<vmem>>, %arg13: memref<1x32xf32, #tpu.memory_space<vmem>>, %arg14: memref<10x32xf32, #tpu.memory_space<vmem>>, %arg15: memref<1x32xf32, #tpu.memory_space<vmem>>, %arg16: memref<32x32xf32, #tpu.memory_space<vmem>>, %arg17: memref<32x32xf32, #tpu.memory_space<vmem>>, %arg18: memref<32x32xf32, #tpu.memory_space<vmem>>, %arg19: memref<1x32xf32, #tpu.memory_space<vmem>>, %arg20: memref<8x32xbf16, #tpu.memory_space<vmem>>, %arg21: memref<8x32xf32, #tpu.memory_space<vmem>>, %arg22: memref<8x1x8xf32, #tpu.memory_space<vmem>>) attributes {dimension_semantics = [], scalar_prefetch = 0 : i64, scratch_operands = 0 : i64, tpu.core_type = #tpu.core_type<tc>} {
    %c0 = arith.constant 0 : index
    %c0_0 = arith.constant 0 : index
    %0 = vector.load %arg0[%c0, %c0_0] : memref<8x16xf32, #tpu.memory_space<vmem>>, vector<8x16xf32>
    %c0_1 = arith.constant 0 : index
    %c0_2 = arith.constant 0 : index
    %1 = vector.load %arg1[%c0_1, %c0_2] : memref<8x32xf32, #tpu.memory_space<vmem>>, vector<8x32xf32>
    %c0_3 = arith.constant 0 : index
    %c0_4 = arith.constant 0 : index
    %c0_5 = arith.constant 0 : index
    %2 = vector.load %arg2[%c0_3, %c0_4, %c0_5] : memref<8x8x32xf32, #tpu.memory_space<vmem>>, vector<8x8x32xf32>
    %c0_6 = arith.constant 0 : index
    %c0_7 = arith.constant 0 : index
    %3 = vector.load %arg3[%c0_6, %c0_7] : memref<8x10xf32, #tpu.memory_space<vmem>>, vector<8x10xf32>
    %c0_8 = arith.constant 0 : index
    %c0_9 = arith.constant 0 : index
    %4 = vector.load %arg4[%c0_8, %c0_9] : memref<16x32xf32, #tpu.memory_space<vmem>>, vector<16x32xf32>
    %cst = arith.constant dense<0.000000e+00> : vector<8x32xf32>
    %5 = tpu.matmul %0, %4, %cst {dimension_numbers = #tpu.dot_dimension_numbers<[1], [0], [0], [1], [0, 0, 1, 1], [], []>} : vector<8x16xf32>, vector<16x32xf32>, vector<8x32xf32> -> vector<8x32xf32>
    %c0_10 = arith.constant 0 : index
    %c0_11 = arith.constant 0 : index
    %6 = vector.load %arg7[%c0_10, %c0_11] : memref<32x32xf32, #tpu.memory_space<vmem>>, vector<32x32xf32>
    %cst_12 = arith.constant dense<0.000000e+00> : vector<8x32xf32>
    %7 = tpu.matmul %1, %6, %cst_12 {dimension_numbers = #tpu.dot_dimension_numbers<[1], [0], [0], [1], [0, 0, 1, 1], [], []>} : vector<8x32xf32>, vector<32x32xf32>, vector<8x32xf32> -> vector<8x32xf32>
    %8 = arith.addf %5, %7 : vector<8x32xf32>
    %c0_13 = arith.constant 0 : index
    %c0_14 = arith.constant 0 : index
    %9 = vector.load %arg10[%c0_13, %c0_14] : memref<1x32xf32, #tpu.memory_space<vmem>>, vector<1x32xf32>
    %10 = vector.broadcast %9 : vector<1x32xf32> to vector<8x32xf32>
    %11 = arith.addf %8, %10 : vector<8x32xf32>
    %12 = arith.negf %11 : vector<8x32xf32>
    %13 = math.exp %12 : vector<8x32xf32>
    %cst_15 = arith.constant 1.000000e+00 : f32
    %14 = vector.broadcast %cst_15 : f32 to vector<8x32xf32>
    %15 = arith.addf %14, %13 : vector<8x32xf32>
    %16 = arith.divf %14, %15 : vector<8x32xf32>
    %c0_16 = arith.constant 0 : index
    %c0_17 = arith.constant 0 : index
    %17 = vector.load %arg5[%c0_16, %c0_17] : memref<16x32xf32, #tpu.memory_space<vmem>>, vector<16x32xf32>
    %cst_18 = arith.constant dense<0.000000e+00> : vector<8x32xf32>
    %18 = tpu.matmul %0, %17, %cst_18 {dimension_numbers = #tpu.dot_dimension_numbers<[1], [0], [0], [1], [0, 0, 1, 1], [], []>} : vector<8x16xf32>, vector<16x32xf32>, vector<8x32xf32> -> vector<8x32xf32>
    %c0_19 = arith.constant 0 : index
    %c0_20 = arith.constant 0 : index
    %19 = vector.load %arg8[%c0_19, %c0_20] : memref<32x32xf32, #tpu.memory_space<vmem>>, vector<32x32xf32>
    %cst_21 = arith.constant dense<0.000000e+00> : vector<8x32xf32>
    %20 = tpu.matmul %1, %19, %cst_21 {dimension_numbers = #tpu.dot_dimension_numbers<[1], [0], [0], [1], [0, 0, 1, 1], [], []>} : vector<8x32xf32>, vector<32x32xf32>, vector<8x32xf32> -> vector<8x32xf32>
    %21 = arith.addf %18, %20 : vector<8x32xf32>
    %c0_22 = arith.constant 0 : index
    %c0_23 = arith.constant 0 : index
    %22 = vector.load %arg11[%c0_22, %c0_23] : memref<1x32xf32, #tpu.memory_space<vmem>>, vector<1x32xf32>
    %23 = vector.broadcast %22 : vector<1x32xf32> to vector<8x32xf32>
    %24 = arith.addf %21, %23 : vector<8x32xf32>
    %25 = arith.negf %24 : vector<8x32xf32>
    %26 = math.exp %25 : vector<8x32xf32>
    %cst_24 = arith.constant 1.000000e+00 : f32
    %27 = vector.broadcast %cst_24 : f32 to vector<8x32xf32>
    %28 = arith.addf %27, %26 : vector<8x32xf32>
    %29 = arith.divf %27, %28 : vector<8x32xf32>
    %c0_25 = arith.constant 0 : index
    %c0_26 = arith.constant 0 : index
    %30 = vector.load %arg6[%c0_25, %c0_26] : memref<16x32xf32, #tpu.memory_space<vmem>>, vector<16x32xf32>
    %cst_27 = arith.constant dense<0.000000e+00> : vector<8x32xf32>
    %31 = tpu.matmul %0, %30, %cst_27 {dimension_numbers = #tpu.dot_dimension_numbers<[1], [0], [0], [1], [0, 0, 1, 1], [], []>} : vector<8x16xf32>, vector<16x32xf32>, vector<8x32xf32> -> vector<8x32xf32>
    %c0_28 = arith.constant 0 : index
    %c0_29 = arith.constant 0 : index
    %32 = vector.load %arg12[%c0_28, %c0_29] : memref<1x32xf32, #tpu.memory_space<vmem>>, vector<1x32xf32>
    %33 = vector.broadcast %32 : vector<1x32xf32> to vector<8x32xf32>
    %34 = arith.addf %31, %33 : vector<8x32xf32>
    %c0_30 = arith.constant 0 : index
    %c0_31 = arith.constant 0 : index
    %35 = vector.load %arg9[%c0_30, %c0_31] : memref<32x32xf32, #tpu.memory_space<vmem>>, vector<32x32xf32>
    %cst_32 = arith.constant dense<0.000000e+00> : vector<8x32xf32>
    %36 = tpu.matmul %1, %35, %cst_32 {dimension_numbers = #tpu.dot_dimension_numbers<[1], [0], [0], [1], [0, 0, 1, 1], [], []>} : vector<8x32xf32>, vector<32x32xf32>, vector<8x32xf32> -> vector<8x32xf32>
    %c0_33 = arith.constant 0 : index
    %c0_34 = arith.constant 0 : index
    %37 = vector.load %arg13[%c0_33, %c0_34] : memref<1x32xf32, #tpu.memory_space<vmem>>, vector<1x32xf32>
    %38 = vector.broadcast %37 : vector<1x32xf32> to vector<8x32xf32>
    %39 = arith.addf %36, %38 : vector<8x32xf32>
    %40 = arith.mulf %16, %39 : vector<8x32xf32>
    %41 = arith.addf %34, %40 : vector<8x32xf32>
    %42 = math.tanh %41 : vector<8x32xf32>
    %cst_35 = arith.constant 1.000000e+00 : f32
    %43 = vector.broadcast %cst_35 : f32 to vector<8x32xf32>
    %44 = arith.subf %43, %29 : vector<8x32xf32>
    %45 = arith.mulf %44, %42 : vector<8x32xf32>
    %46 = arith.mulf %29, %1 : vector<8x32xf32>
    %47 = arith.addf %45, %46 : vector<8x32xf32>
    %48 = vector.shape_cast %47 : vector<8x32xf32> to vector<8x1x32xf32>
    "tpu.trace_start"() <{level = 10 : i32, message = "bqh,bsh->bqs"}> : () -> ()
    %cst_36 = arith.constant dense<0.000000e+00> : vector<8x1x8xf32>
    %49 = tpu.matmul %48, %2, %cst_36 {dimension_numbers = #tpu.dot_dimension_numbers<[2], [2], [1], [1], [0, 0, 0, 1, 1, 1], [0], [0]>} : vector<8x1x32xf32>, vector<8x8x32xf32>, vector<8x1x8xf32> -> vector<8x1x8xf32>
    "tpu.trace_stop"() : () -> ()
    %cst_37 = arith.constant dense<0xFF800000> : vector<8x1xf32>
    %50 = vector.multi_reduction <maximumf>, %49, %cst_37 [2] : vector<8x1x8xf32> to vector<8x1xf32>
    %51 = vector.shape_cast %50 : vector<8x1xf32> to vector<8x1x1xf32>
    %52 = vector.broadcast %51 : vector<8x1x1xf32> to vector<8x1x8xf32>
    %53 = arith.subf %49, %52 : vector<8x1x8xf32>
    %54 = math.exp %53 : vector<8x1x8xf32>
    %cst_38 = arith.constant dense<0.000000e+00> : vector<8x1xf32>
    %55 = vector.multi_reduction <add>, %54, %cst_38 [2] : vector<8x1x8xf32> to vector<8x1xf32>
    %56 = vector.shape_cast %55 : vector<8x1xf32> to vector<8x1x1xf32>
    %57 = vector.broadcast %56 : vector<8x1x1xf32> to vector<8x1x8xf32>
    %58 = arith.divf %54, %57 : vector<8x1x8xf32>
    "tpu.trace_start"() <{level = 10 : i32, message = "bqs,bsh->bqh"}> : () -> ()
    %cst_39 = arith.constant dense<0.000000e+00> : vector<8x1x32xf32>
    %59 = tpu.matmul %58, %2, %cst_39 {dimension_numbers = #tpu.dot_dimension_numbers<[2], [1], [1], [2], [0, 0, 0, 1, 1, 2], [0], [0]>} : vector<8x1x8xf32>, vector<8x8x32xf32>, vector<8x1x32xf32> -> vector<8x1x32xf32>
    "tpu.trace_stop"() : () -> ()
    %60 = vector.shape_cast %59 : vector<8x1x32xf32> to vector<8x32xf32>
    %c0_40 = arith.constant 0 : index
    %c0_41 = arith.constant 0 : index
    %61 = vector.load %arg14[%c0_40, %c0_41] : memref<10x32xf32, #tpu.memory_space<vmem>>, vector<10x32xf32>
    %cst_42 = arith.constant dense<0.000000e+00> : vector<8x32xf32>
    %62 = tpu.matmul %3, %61, %cst_42 {dimension_numbers = #tpu.dot_dimension_numbers<[1], [0], [0], [1], [0, 0, 1, 1], [], []>} : vector<8x10xf32>, vector<10x32xf32>, vector<8x32xf32> -> vector<8x32xf32>
    %c0_43 = arith.constant 0 : index
    %c0_44 = arith.constant 0 : index
    %63 = vector.load %arg15[%c0_43, %c0_44] : memref<1x32xf32, #tpu.memory_space<vmem>>, vector<1x32xf32>
    %64 = vector.broadcast %63 : vector<1x32xf32> to vector<8x32xf32>
    %65 = arith.addf %62, %64 : vector<8x32xf32>
    %c0_45 = arith.constant 0 : index
    %c0_46 = arith.constant 0 : index
    %66 = vector.load %arg16[%c0_45, %c0_46] : memref<32x32xf32, #tpu.memory_space<vmem>>, vector<32x32xf32>
    %cst_47 = arith.constant dense<0.000000e+00> : vector<8x32xf32>
    %67 = tpu.matmul %47, %66, %cst_47 {dimension_numbers = #tpu.dot_dimension_numbers<[1], [0], [0], [1], [0, 0, 1, 1], [], []>} : vector<8x32xf32>, vector<32x32xf32>, vector<8x32xf32> -> vector<8x32xf32>
    %c0_48 = arith.constant 0 : index
    %c0_49 = arith.constant 0 : index
    %68 = vector.load %arg17[%c0_48, %c0_49] : memref<32x32xf32, #tpu.memory_space<vmem>>, vector<32x32xf32>
    %cst_50 = arith.constant dense<0.000000e+00> : vector<8x32xf32>
    %69 = tpu.matmul %60, %68, %cst_50 {dimension_numbers = #tpu.dot_dimension_numbers<[1], [0], [0], [1], [0, 0, 1, 1], [], []>} : vector<8x32xf32>, vector<32x32xf32>, vector<8x32xf32> -> vector<8x32xf32>
    %70 = arith.addf %67, %69 : vector<8x32xf32>
    %c0_51 = arith.constant 0 : index
    %c0_52 = arith.constant 0 : index
    %71 = vector.load %arg18[%c0_51, %c0_52] : memref<32x32xf32, #tpu.memory_space<vmem>>, vector<32x32xf32>
    %cst_53 = arith.constant dense<0.000000e+00> : vector<8x32xf32>
    %72 = tpu.matmul %65, %71, %cst_53 {dimension_numbers = #tpu.dot_dimension_numbers<[1], [0], [0], [1], [0, 0, 1, 1], [], []>} : vector<8x32xf32>, vector<32x32xf32>, vector<8x32xf32> -> vector<8x32xf32>
    %73 = arith.addf %70, %72 : vector<8x32xf32>
    %c0_54 = arith.constant 0 : index
    %c0_55 = arith.constant 0 : index
    %74 = vector.load %arg19[%c0_54, %c0_55] : memref<1x32xf32, #tpu.memory_space<vmem>>, vector<1x32xf32>
    %75 = vector.broadcast %74 : vector<1x32xf32> to vector<8x32xf32>
    %76 = arith.addf %73, %75 : vector<8x32xf32>
    %77 = math.tanh %76 : vector<8x32xf32>
    %78 = arith.truncf %77 : vector<8x32xf32> to vector<8x32xbf16>
    %c0_56 = arith.constant 0 : index
    %c0_57 = arith.constant 0 : index
    %79 = vector.load %arg20[%c0_56, %c0_57] : memref<8x32xbf16, #tpu.memory_space<vmem>>, vector<8x32xbf16>
    tpu.vector_store %arg20[%c0_56, %c0_57], %78 {strides = array<i32>} : memref<8x32xbf16, #tpu.memory_space<vmem>>, vector<8x32xbf16>,
    %c0_58 = arith.constant 0 : index
    %c0_59 = arith.constant 0 : index
    %80 = vector.load %arg21[%c0_58, %c0_59] : memref<8x32xf32, #tpu.memory_space<vmem>>, vector<8x32xf32>
    tpu.vector_store %arg21[%c0_58, %c0_59], %47 {strides = array<i32>} : memref<8x32xf32, #tpu.memory_space<vmem>>, vector<8x32xf32>,
    %c0_60 = arith.constant 0 : index
    %c0_61 = arith.constant 0 : index
    %c0_62 = arith.constant 0 : index
    %81 = vector.load %arg22[%c0_60, %c0_61, %c0_62] : memref<8x1x8xf32, #tpu.memory_space<vmem>>, vector<8x1x8xf32>
    tpu.vector_store %arg22[%c0_60, %c0_61, %c0_62], %58 {strides = array<i32>} : memref<8x1x8xf32, #tpu.memory_space<vmem>>, vector<8x1x8xf32>,
    return
  }
}

</mosaic_0001>

<llo_original>
// kernel: attn_decoder_forward.3
$region0: #{attn_decoder_forward.3}
  #allocation0 [shape = 'u32[]', space=smem, size = 0x4, offset = 0x4, fixed_abs, tag = 'smem constant byte address 0x4 - core index']
  #allocation1 [shape = 'u32[144,128]{1,0:T(1,128)}', space=vmem, size = 0x12000, scoped, tag = 'internal scratch']
  %s0 = inlined_call_operand.vmem [shape: bf16[8,32], index: 0, kind: input, shape index: {}]
  %s1 = inlined_call_operand.vmem [shape: bf16[1,32,128], index: 1, kind: input, shape index: {}]
  %s2 = inlined_call_operand.vmem [shape: f32[1,128], index: 2, kind: input, shape index: {}]
  %s3 = inlined_call_operand.vmem [shape: f32[8,128], index: 3, kind: output, shape index: {}]
  %s4 = sld [smem:[#allocation0]]
  $region22: #{attn_decoder_forward.3} parent=0
    _
  %s6 = ssub.s32 1, %s4
  %s7 = scalar_select 0, %s6, %s4
  // Predicated region
  $region2: #{attn_decoder_forward.3} parent=0 // pred_check
    _
  $region3: #{attn_decoder_forward.3} parent=0 // pred_check_branch
    %9 = sbr.rel (0) target = $region5
  $region4: #{attn_decoder_forward.3} parent=0 // pred_region
    _
  $region5: #{attn_decoder_forward.3} parent=0 // pred_fallthru
    _
  // Predicated region
  $region6: #{attn_decoder_forward.3} parent=0 // pred_check
    _
  $region7: #{attn_decoder_forward.3} parent=0 // pred_check_branch
    %11 = sbr.rel (0) target = $region9
  $region8: #{attn_decoder_forward.3} parent=0 // pred_region
    _
  $region9: #{attn_decoder_forward.3} parent=0 // pred_fallthru
    _
  // Predicated region
  $region10: #{attn_decoder_forward.3} parent=0 // pred_check
    _
  $region11: #{attn_decoder_forward.3} parent=0 // pred_check_branch
    %13 = sbr.rel (0) target = $region13
  $region12: #{attn_decoder_forward.3} parent=0 // pred_region
    _
  $region13: #{attn_decoder_forward.3} parent=0 // pred_fallthru
    _
  %v15 = vld [vmem:[%s0] sm:$0xf]
  %v16 = vld [vmem:[%s1] sm:$0xf]
  %v17 = vld [vmem:[%s1 + $0x4] sm:$0xf]
  %v18 = vld [vmem:[%s1 + $0x8] sm:$0xf]
  %v19 = vld [vmem:[%s1 + $0xc] sm:$0xf]
  %v20 = vld [vmem:[%s2] sm:$0x1]
  %v22 = vlaneseq
  %v23 = vshrl.u32 %v22, 7
  %v24 = vsub.s32 0, %v23
  %v25 = vrot.slane %v20, %v24
  %v31 = vunpack.c.l.b16 %v16
  %v32 = vunpack.c.l.b16 %v17
  %v33 = vunpack.c.l.b16 %v18
  %v34 = vunpack.c.l.b16 %v19
  %v35 = vpack.c.b16 %v32, %v31
  %v36 = vpack.c.b16 %v34, %v33
  %vm39 = vcmask 261120
  %v41 = vsel %vm39, %v15, 0
  %43 = vmatprep.subr.bf16.mxu0 0
  %44 = vmatpush1.bf16.msra.mxu0 0
  %45 = vmatprep.subr.bf16.mxu0 0
  %46 = vmatpush1.bf16.msra.mxu0 0
  %47 = vmatprep.subr.bf16.mxu0 0
  %48 = vmatpush1.bf16.msra.mxu0 0
  %49 = vmatprep.subr.bf16.mxu0 0
  %50 = vmatpush1.bf16.msra.mxu0 0
  %51 = vmatprep.subr.bf16.mxu0 0
  %52 = vmatpush1.bf16.msra.mxu0 0
  %53 = vmatprep.subr.bf16.mxu0 0
  %54 = vmatpush1.bf16.msra.mxu0 0
  %55 = vmatprep.subr.bf16.mxu0 0
  %56 = vmatpush1.bf16.msra.mxu0 %v36
  %57 = vmatprep.subr.bf16.mxu0 0
  %58 = vmatpush1.bf16.msra.mxu0 %v35
  %59 = vmatprep.subr.bf16.mxu0 0
  %60 = vmatpush2.bf16.msra.mxu0 0
  %61 = vmatprep.subr.bf16.mxu0 0
  %62 = vmatpush2.bf16.msra.mxu0 0
  %63 = vmatprep.subr.bf16.mxu0 0
  %64 = vmatpush2.bf16.msra.mxu0 0
  %65 = vmatprep.subr.bf16.mxu0 0
  %66 = vmatpush2.bf16.msra.mxu0 0
  %67 = vmatprep.subr.bf16.mxu0 0
  %68 = vmatpush2.bf16.msra.mxu0 0
  %69 = vmatprep.subr.bf16.mxu0 0
  %70 = vmatpush2.bf16.msra.mxu0 0
  %71 = vmatprep.subr.bf16.mxu0 0
  %72 = vmatpush2.bf16.msra.mxu0 0
  %73 = vmatprep.subr.bf16.mxu0 0
  %74 = vmatpush2.bf16.msra.mxu0 0
  %75 = vmatprep.mubr.bf16.mxu0 0
  %76 = vmatmul.mubr.bf16.gmra.mxu0 %v41
  %v77 = vpop.f32.mrf.mxu0
  %v78 = vadd.f32 %v25, %v77
  %v79 = vpop.f32.mrf.mxu0
  %v80 = vpop.f32.mrf.mxu0
  %v81 = vpop.f32.mrf.mxu0
  %82 = vdwg.mxu0
  %83 = vst [vmem:[%s3] sm:$0xff] %v78
  // Predicated region
  $region14: #{attn_decoder_forward.3} parent=0 // pred_check
    _
  $region15: #{attn_decoder_forward.3} parent=0 // pred_check_branch
    %85 = sbr.rel (0) target = $region17
  $region16: #{attn_decoder_forward.3} parent=0 // pred_region
    _
  $region17: #{attn_decoder_forward.3} parent=0 // pred_fallthru
    _
  // Predicated region
  $region18: #{attn_decoder_forward.3} parent=0 // pred_check
    _
  $region19: #{attn_decoder_forward.3} parent=0 // pred_check_branch
    %87 = sbr.rel (0) target = $region21
  $region20: #{attn_decoder_forward.3} parent=0 // pred_region
    _
  $region21: #{attn_decoder_forward.3} parent=0 // pred_fallthru
    _

// kernel: attn_decoder_forward.2
$region0: #{attn_decoder_forward.2}
  #allocation0 [shape = 'u32[]', space=smem, size = 0x4, offset = 0x4, fixed_abs, tag = 'smem constant byte address 0x4 - core index']
  #allocation1 [shape = 'u32[144,128]{1,0:T(1,128)}', space=vmem, size = 0x12000, scoped, tag = 'internal scratch']
  %s0 = inlined_call_operand.vmem [shape: f32[8,16], index: 0, kind: input, shape index: {}]
  %s1 = inlined_call_operand.vmem [shape: f32[8,32], index: 1, kind: input, shape index: {}]
  %s2 = inlined_call_operand.vmem [shape: f32[8,8,32], index: 2, kind: input, shape index: {}]
  %s3 = inlined_call_operand.vmem [shape: f32[8,10], index: 3, kind: input, shape index: {}]
  %s4 = inlined_call_operand.hbm [shape: f32[16,32], index: 4, kind: input, shape index: {}]
  %s5 = inlined_call_operand.hbm [shape: f32[16,32], index: 5, kind: input, shape index: {}]
  %s6 = inlined_call_operand.hbm [shape: f32[16,32], index: 6, kind: input, shape index: {}]
  %s7 = inlined_call_operand.vmem [shape: f32[32,32], index: 7, kind: input, shape index: {}]
  %s8 = inlined_call_operand.vmem [shape: f32[32,32], index: 8, kind: input, shape index: {}]
  %s9 = inlined_call_operand.vmem [shape: f32[32,32], index: 9, kind: input, shape index: {}]
  %s10 = inlined_call_operand.hbm [shape: f32[1,32], index: 10, kind: input, shape index: {}]
  %s11 = inlined_call_operand.hbm [shape: f32[1,32], index: 11, kind: input, shape index: {}]
  %s12 = inlined_call_operand.hbm [shape: f32[1,32], index: 12, kind: input, shape index: {}]
  %s13 = inlined_call_operand.hbm [shape: f32[1,32], index: 13, kind: input, shape index: {}]
  %s14 = inlined_call_operand.vmem [shape: f32[10,32], index: 14, kind: input, shape index: {}]
  %s15 = inlined_call_operand.hbm [shape: f32[1,32], index: 15, kind: input, shape index: {}]
  %s16 = inlined_call_operand.vmem [shape: f32[32,32], index: 16, kind: input, shape index: {}]
  %s17 = inlined_call_operand.vmem [shape: f32[32,32], index: 17, kind: input, shape index: {}]
  %s18 = inlined_call_operand.vmem [shape: f32[32,32], index: 18, kind: input, shape index: {}]
  %s19 = inlined_call_operand.hbm [shape: f32[1,32], index: 19, kind: input, shape index: {}]
  %s20 = inlined_call_operand.vmem [shape: bf16[8,32], index: 20, kind: output, shape index: {0}]
  %s21 = inlined_call_operand.vmem [shape: f32[8,32], index: 21, kind: output, shape index: {1}]
  %s22 = inlined_call_operand.vmem [shape: f32[8,1,8], index: 22, kind: output, shape index: {2}]
  %23 = xla_tuple %s20, %s21, %s22
  %s24 = sld [smem:[#allocation0]]
  $region142: #{attn_decoder_forward.2} parent=0
    _
  %s26 = ssub.s32 1, %s24
  %s27 = scalar_select 0, %s26, %s24
  $region1: #{attn_decoder_forward.2} parent=0
    #allocation2 [shape = 'u8[8192]{0}', space=vmem, size = 0x2000, scoped, tag = 'input window, operand 4, single buffered']
    #allocation3 [shape = 's32[1]{0}', space=sflag, size = 0x4, scoped, tag = 'scoped memory for attn_decoder_forward.2']
    #allocation4 [shape = 'u8[8192]{0}', space=vmem, size = 0x2000, scoped, tag = 'input window, operand 5, single buffered']
    #allocation5 [shape = 's32[1]{0}', space=sflag, size = 0x4, scoped, tag = 'scoped memory for attn_decoder_forward.2']
    #allocation6 [shape = 'u8[8192]{0}', space=vmem, size = 0x2000, scoped, tag = 'input window, operand 6, single buffered']
    #allocation7 [shape = 'u8[512]{0}', space=vmem, size = 0x400, scoped, tag = 'input window, operand 10, single buffered']
    #allocation8 [shape = 's32[1]{0}', space=sflag, size = 0x4, scoped, tag = 'scoped memory for attn_decoder_forward.2']
    #allocation9 [shape = 'u8[512]{0}', space=vmem, size = 0x400, scoped, tag = 'input window, operand 11, single buffered']
    #allocation10 [shape = 'u8[512]{0}', space=vmem, size = 0x400, scoped, tag = 'input window, operand 12, single buffered']
    #allocation11 [shape = 's32[1]{0}', space=sflag, size = 0x4, scoped, tag = 'scoped memory for attn_decoder_forward.2']
    #allocation12 [shape = 'u8[512]{0}', space=vmem, size = 0x400, scoped, tag = 'input window, operand 13, single buffered']
    #allocation13 [shape = 'u8[512]{0}', space=vmem, size = 0x400, scoped, tag = 'input window, operand 15, single buffered']
    #allocation14 [shape = 's32[1]{0}', space=sflag, size = 0x4, scoped, tag = 'scoped memory for attn_decoder_forward.2']
    #allocation15 [shape = 'u8[512]{0}', space=vmem, size = 0x400, scoped, tag = 'input window, operand 19, single buffered']
    %28 = vsyncpa [#allocation3], 0
    %29 = vsyncpa [#allocation5], 0
    %30 = vsyncpa [#allocation8], 0
    %31 = vsyncpa [#allocation11], 0
    %32 = vsyncpa [#allocation14], 0
    // Predicated region
    $region2: #{attn_decoder_forward.2} parent=1 // pred_check
      _
    $region3: #{attn_decoder_forward.2} parent=1 // pred_check_branch
      %34 = sbr.rel (0) target = $region5
    $region4: #{attn_decoder_forward.2} parent=1 // pred_region
      _
    $region5: #{attn_decoder_forward.2} parent=1 // pred_fallthru
      _
    // Predicated region
    $region6: #{attn_decoder_forward.2} parent=1 // pred_check
      _
    $region7: #{attn_decoder_forward.2} parent=1 // pred_check_branch
      %36 = sbr.rel (0) target = $region9
    $region8: #{attn_decoder_forward.2} parent=1 // pred_region
      _
    $region9: #{attn_decoder_forward.2} parent=1 // pred_fallthru
      _
    // Predicated region
    $region10: #{attn_decoder_forward.2} parent=1 // pred_check
      _
    $region11: #{attn_decoder_forward.2} parent=1 // pred_check_branch
      %38 = sbr.rel (0) target = $region13
    $region12: #{attn_decoder_forward.2} parent=1 // pred_region
      _
    $region13: #{attn_decoder_forward.2} parent=1 // pred_fallthru
      _
    // Predicated region
    $region14: #{attn_decoder_forward.2} parent=1 // pred_check
      _
    $region15: #{attn_decoder_forward.2} parent=1 // pred_check_branch
      %40 = sbr.rel (0) target = $region17
    $region16: #{attn_decoder_forward.2} parent=1 // pred_region
      _
    $region17: #{attn_decoder_forward.2} parent=1 // pred_fallthru
      _
    // Predicated region
    $region18: #{attn_decoder_forward.2} parent=1 // pred_check
      _
    $region19: #{attn_decoder_forward.2} parent=1 // pred_check_branch
      %42 = sbr.rel (0) target = $region21
    $region20: #{attn_decoder_forward.2} parent=1 // pred_region
      %s44 = ssub.s32 256, 256
      %45 = vsyncadd [#allocation3], %s44
      %s46 = sshll.u32 [#allocation2], 4
      %s47 = int_to_ptr.vmem [resolvable:$true] %s46
      %52 = dma.hbm_to_vmem [thread:$0]  %s4, 256, %s47, [#allocation3], 128, 128, 8
    $region21: #{attn_decoder_forward.2} parent=1 // pred_fallthru
      _
    // Predicated region
    $region22: #{attn_decoder_forward.2} parent=1 // pred_check
      _
    $region23: #{attn_decoder_forward.2} parent=1 // pred_check_branch
      %54 = sbr.rel (0) target = $region25
    $region24: #{attn_decoder_forward.2} parent=1 // pred_region
      %s56 = ssub.s32 256, 256
      %57 = vsyncadd [#allocation5], %s56
      %s58 = sshll.u32 [#allocation4], 4
      %s59 = int_to_ptr.vmem [resolvable:$true] %s58
      %64 = dma.hbm_to_vmem [thread:$0]  %s5, 256, %s59, [#allocation5], 128, 128, 8
    $region25: #{attn_decoder_forward.2} parent=1 // pred_fallthru
      _
    // Predicated region
    $region26: #{attn_decoder_forward.2} parent=1 // pred_check
      _
    $region27: #{attn_decoder_forward.2} parent=1 // pred_check_branch
      %66 = sbr.rel (0) target = $region29
    $region28: #{attn_decoder_forward.2} parent=1 // pred_region
      %s68 = ssub.s32 256, 256
      %69 = vsyncadd [#allocation5], %s68
      %s70 = sshll.u32 [#allocation6], 4
      %s71 = int_to_ptr.vmem [resolvable:$true] %s70
      %76 = dma.hbm_to_vmem [thread:$0]  %s6, 256, %s71, [#allocation5], 128, 128, 8
    $region29: #{attn_decoder_forward.2} parent=1 // pred_fallthru
      _
    // Predicated region
    $region30: #{attn_decoder_forward.2} parent=1 // pred_check
      _
    $region31: #{attn_decoder_forward.2} parent=1 // pred_check_branch
      %78 = sbr.rel (0) target = $region33
    $region32: #{attn_decoder_forward.2} parent=1 // pred_region
      _
    $region33: #{attn_decoder_forward.2} parent=1 // pred_fallthru
      _
    // Predicated region
    $region34: #{attn_decoder_forward.2} parent=1 // pred_check
      _
    $region35: #{attn_decoder_forward.2} parent=1 // pred_check_branch
      %80 = sbr.rel (0) target = $region37
    $region36: #{attn_decoder_forward.2} parent=1 // pred_region
      _
    $region37: #{attn_decoder_forward.2} parent=1 // pred_fallthru
      _
    // Predicated region
    $region38: #{attn_decoder_forward.2} parent=1 // pred_check
      _
    $region39: #{attn_decoder_forward.2} parent=1 // pred_check_branch
      %82 = sbr.rel (0) target = $region41
    $region40: #{attn_decoder_forward.2} parent=1 // pred_region
      _
    $region41: #{attn_decoder_forward.2} parent=1 // pred_fallthru
      _
    // Predicated region
    $region42: #{attn_decoder_forward.2} parent=1 // pred_check
      _
    $region43: #{attn_decoder_forward.2} parent=1 // pred_check_branch
      %84 = sbr.rel (0) target = $region45
    $region44: #{attn_decoder_forward.2} parent=1 // pred_region
      %s86 = ssub.s32 16, 16
      %87 = vsyncadd [#allocation8], %s86
      %s89 = sshll.u32 [#allocation7], 4
      %s90 = int_to_ptr.vmem [resolvable:$true] %s89
      %92 = dma.hbm_to_vmem [thread:$0]  %s10, 16, %s90, [#allocation8]
    $region45: #{attn_decoder_forward.2} parent=1 // pred_fallthru
      _
    // Predicated region
    $region46: #{attn_decoder_forward.2} parent=1 // pred_check
      _
    $region47: #{attn_decoder_forward.2} parent=1 // pred_check_branch
      %94 = sbr.rel (0) target = $region49
    $region48: #{attn_decoder_forward.2} parent=1 // pred_region
      %s96 = ssub.s32 16, 16
      %97 = vsyncadd [#allocation8], %s96
      %s99 = sshll.u32 [#allocation9], 4
      %s100 = int_to_ptr.vmem [resolvable:$true] %s99
      %102 = dma.hbm_to_vmem [thread:$0]  %s11, 16, %s100, [#allocation8]
    $region49: #{attn_decoder_forward.2} parent=1 // pred_fallthru
      _
    // Predicated region
    $region50: #{attn_decoder_forward.2} parent=1 // pred_check
      _
    $region51: #{attn_decoder_forward.2} parent=1 // pred_check_branch
      %104 = sbr.rel (0) target = $region53
    $region52: #{attn_decoder_forward.2} parent=1 // pred_region
      %s106 = ssub.s32 16, 16
      %107 = vsyncadd [#allocation11], %s106
      %s109 = sshll.u32 [#allocation10], 4
      %s110 = int_to_ptr.vmem [resolvable:$true] %s109
      %112 = dma.hbm_to_vmem [thread:$0]  %s12, 16, %s110, [#allocation11]
    $region53: #{attn_decoder_forward.2} parent=1 // pred_fallthru
      _
    // Predicated region
    $region54: #{attn_decoder_forward.2} parent=1 // pred_check
      _
    $region55: #{attn_decoder_forward.2} parent=1 // pred_check_branch
      %114 = sbr.rel (0) target = $region57
    $region56: #{attn_decoder_forward.2} parent=1 // pred_region
      %s116 = ssub.s32 16, 16
      %117 = vsyncadd [#allocation11], %s116
      %s119 = sshll.u32 [#allocation12], 4
      %s120 = int_to_ptr.vmem [resolvable:$true] %s119
      %122 = dma.hbm_to_vmem [thread:$0]  %s13, 16, %s120, [#allocation11]
    $region57: #{attn_decoder_forward.2} parent=1 // pred_fallthru
      _
    // Predicated region
    $region58: #{attn_decoder_forward.2} parent=1 // pred_check
      _
    $region59: #{attn_decoder_forward.2} parent=1 // pred_check_branch
      %124 = sbr.rel (0) target = $region61
    $region60: #{attn_decoder_forward.2} parent=1 // pred_region
      _
    $region61: #{attn_decoder_forward.2} parent=1 // pred_fallthru
      _
    // Predicated region
    $region62: #{attn_decoder_forward.2} parent=1 // pred_check
      _
    $region63: #{attn_decoder_forward.2} parent=1 // pred_check_branch
      %126 = sbr.rel (0) target = $region65
    $region64: #{attn_decoder_forward.2} parent=1 // pred_region
      %s128 = ssub.s32 16, 16
      %129 = vsyncadd [#allocation14], %s128
      %s131 = sshll.u32 [#allocation13], 4
      %s132 = int_to_ptr.vmem [resolvable:$true] %s131
      %134 = dma.hbm_to_vmem [thread:$0]  %s15, 16, %s132, [#allocation14]
    $region65: #{attn_decoder_forward.2} parent=1 // pred_fallthru
      _
    // Predicated region
    $region66: #{attn_decoder_forward.2} parent=1 // pred_check
      _
    $region67: #{attn_decoder_forward.2} parent=1 // pred_check_branch
      %136 = sbr.rel (0) target = $region69
    $region68: #{attn_decoder_forward.2} parent=1 // pred_region
      _
    $region69: #{attn_decoder_forward.2} parent=1 // pred_fallthru
      _
    // Predicated region
    $region70: #{attn_decoder_forward.2} parent=1 // pred_check
      _
    $region71: #{attn_decoder_forward.2} parent=1 // pred_check_branch
      %138 = sbr.rel (0) target = $region73
    $region72: #{attn_decoder_forward.2} parent=1 // pred_region
      _
    $region73: #{attn_decoder_forward.2} parent=1 // pred_fallthru
      _
    // Predicated region
    $region74: #{attn_decoder_forward.2} parent=1 // pred_check
      _
    $region75: #{attn_decoder_forward.2} parent=1 // pred_check_branch
      %140 = sbr.rel (0) target = $region77
    $region76: #{attn_decoder_forward.2} parent=1 // pred_region
      _
    $region77: #{attn_decoder_forward.2} parent=1 // pred_fallthru
      _
    // Predicated region
    $region78: #{attn_decoder_forward.2} parent=1 // pred_check
      _
    $region79: #{attn_decoder_forward.2} parent=1 // pred_check_branch
      %142 = sbr.rel (0) target = $region81
    $region80: #{attn_decoder_forward.2} parent=1 // pred_region
      %s144 = ssub.s32 16, 16
      %145 = vsyncadd [#allocation14], %s144
      %s147 = sshll.u32 [#allocation15], 4
      %s148 = int_to_ptr.vmem [resolvable:$true] %s147
      %150 = dma.hbm_to_vmem [thread:$0]  %s19, 16, %s148, [#allocation14]
    $region81: #{attn_decoder_forward.2} parent=1 // pred_fallthru
      _
    // Predicated region
    $region82: #{attn_decoder_forward.2} parent=1 // pred_check
      _
    $region83: #{attn_decoder_forward.2} parent=1 // pred_check_branch
      %152 = sbr.rel (0) target = $region85
    $region84: #{attn_decoder_forward.2} parent=1 // pred_region
      %153 = dma.done [#allocation3], 256
    $region85: #{attn_decoder_forward.2} parent=1 // pred_fallthru
      _
    // Predicated region
    $region86: #{attn_decoder_forward.2} parent=1 // pred_check
      _
    $region87: #{attn_decoder_forward.2} parent=1 // pred_check_branch
      %155 = sbr.rel (0) target = $region89
    $region88: #{attn_decoder_forward.2} parent=1 // pred_region
      %156 = dma.done [#allocation5], 256
    $region89: #{attn_decoder_forward.2} parent=1 // pred_fallthru
      _
    // Predicated region
    $region90: #{attn_decoder_forward.2} parent=1 // pred_check
      _
    $region91: #{attn_decoder_forward.2} parent=1 // pred_check_branch
      %158 = sbr.rel (0) target = $region93
    $region92: #{attn_decoder_forward.2} parent=1 // pred_region
      %159 = dma.done [#allocation5], 256
    $region93: #{attn_decoder_forward.2} parent=1 // pred_fallthru
      _
    // Predicated region
    $region94: #{attn_decoder_forward.2} parent=1 // pred_check
      _
    $region95: #{attn_decoder_forward.2} parent=1 // pred_check_branch
      %161 = sbr.rel (0) target = $region97
    $region96: #{attn_decoder_forward.2} parent=1 // pred_region
      %162 = dma.done [#allocation8], 16
    $region97: #{attn_decoder_forward.2} parent=1 // pred_fallthru
      _
    // Predicated region
    $region98: #{attn_decoder_forward.2} parent=1 // pred_check
      _
    $region99: #{attn_decoder_forward.2} parent=1 // pred_check_branch
      %164 = sbr.rel (0) target = $region101
    $region100: #{attn_decoder_forward.2} parent=1 // pred_region
      %165 = dma.done [#allocation8], 16
    $region101: #{attn_decoder_forward.2} parent=1 // pred_fallthru
      _
    // Predicated region
    $region102: #{attn_decoder_forward.2} parent=1 // pred_check
      _
    $region103: #{attn_decoder_forward.2} parent=1 // pred_check_branch
      %167 = sbr.rel (0) target = $region105
    $region104: #{attn_decoder_forward.2} parent=1 // pred_region
      %168 = dma.done [#allocation11], 16
    $region105: #{attn_decoder_forward.2} parent=1 // pred_fallthru
      _
    // Predicated region
    $region106: #{attn_decoder_forward.2} parent=1 // pred_check
      _
    $region107: #{attn_decoder_forward.2} parent=1 // pred_check_branch
      %170 = sbr.rel (0) target = $region109
    $region108: #{attn_decoder_forward.2} parent=1 // pred_region
      %171 = dma.done [#allocation11], 16
    $region109: #{attn_decoder_forward.2} parent=1 // pred_fallthru
      _
    // Predicated region
    $region110: #{attn_decoder_forward.2} parent=1 // pred_check
      _
    $region111: #{attn_decoder_forward.2} parent=1 // pred_check_branch
      %173 = sbr.rel (0) target = $region113
    $region112: #{attn_decoder_forward.2} parent=1 // pred_region
      %174 = dma.done [#allocation14], 16
    $region113: #{attn_decoder_forward.2} parent=1 // pred_fallthru
      _
    // Predicated region
    $region114: #{attn_decoder_forward.2} parent=1 // pred_check
      _
    $region115: #{attn_decoder_forward.2} parent=1 // pred_check_branch
      %176 = sbr.rel (0) target = $region117
    $region116: #{attn_decoder_forward.2} parent=1 // pred_region
      %177 = dma.done [#allocation14], 16
    $region117: #{attn_decoder_forward.2} parent=1 // pred_fallthru
      _
    %v178 = vld [vmem:[%s0] sm:$0xff]
    %v179 = vld [vmem:[%s1] sm:$0xff]
    %v180 = vld [vmem:[%s2] sm:$0xff]
    %v181 = vld [vmem:[%s2 + $0x8] sm:$0xff]
    %v182 = vld [vmem:[%s2 + $0x10] sm:$0xff]
    %v183 = vld [vmem:[%s2 + $0x18] sm:$0xff]
    %v184 = vld [vmem:[%s2 + $0x20] sm:$0xff]
    %v185 = vld [vmem:[%s2 + $0x28] sm:$0xff]
    %v186 = vld [vmem:[%s2 + $0x30] sm:$0xff]
    %v187 = vld [vmem:[%s2 + $0x38] sm:$0xff]
    %v188 = vld [vmem:[%s3] sm:$0xff]
    %v189 = vld [vmem:[#allocation2] sm:$0xff]
    %v190 = vld [vmem:[#allocation2 + $0x8] sm:$0xff]
    %v191 = vld [vmem:[%s7] sm:$0xff]
    %v192 = vld [vmem:[%s7 + $0x8] sm:$0xff]
    %v193 = vld [vmem:[%s7 + $0x10] sm:$0xff]
    %v194 = vld [vmem:[%s7 + $0x18] sm:$0xff]
    %vm195 = vcmask 261120
    %v197 = vsel %vm195, %v179, 0
    %199 = vmatprep.subr.mxu0 0.0
    %200 = vmatpush1.msra.mxu0 0.0
    %201 = vmatprep.subr.mxu0 0.0
    %202 = vmatpush1.msra.mxu0 0.0
    %203 = vmatprep.subr.mxu0 0.0
    %204 = vmatpush1.msra.mxu0 0.0
    %205 = vmatprep.subr.mxu0 0.0
    %206 = vmatpush1.msra.mxu0 0.0
    %207 = vmatprep.subr.mxu0 0.0
    %208 = vmatpush1.msra.mxu0 0.0
    %209 = vmatprep.subr.mxu0 0.0
    %210 = vmatpush1.msra.mxu0 0.0
    %211 = vmatprep.subr.mxu0 0.0
    %212 = vmatpush1.msra.mxu0 0.0
    %213 = vmatprep.subr.mxu0 0.0
    %214 = vmatpush1.msra.mxu0 0.0
    %215 = vmatprep.subr.mxu0 0.0
    %216 = vmatpush1.msra.mxu0 0.0
    %217 = vmatprep.subr.mxu0 0.0
    %218 = vmatpush1.msra.mxu0 0.0
    %219 = vmatprep.subr.mxu0 0.0
    %220 = vmatpush1.msra.mxu0 0.0
    %221 = vmatprep.subr.mxu0 0.0
    %222 = vmatpush1.msra.mxu0 0.0
    %223 = vmatprep.subr.mxu0 0.0
    %224 = vmatpush1.msra.mxu0 %v194
    %225 = vmatprep.subr.mxu0 0.0
    %226 = vmatpush1.msra.mxu0 %v193
    %227 = vmatprep.subr.mxu0 0.0
    %228 = vmatpush1.msra.mxu0 %v192
    %229 = vmatprep.subr.mxu0 0.0
    %230 = vmatpush1.msra.mxu0 %v191
    %231 = vmatprep.subr.mxu0 0.0
    %232 = vmatpush2.msra.mxu0 0.0
    %233 = vmatprep.subr.mxu0 0.0
    %234 = vmatpush2.msra.mxu0 0.0
    %235 = vmatprep.subr.mxu0 0.0
    %236 = vmatpush2.msra.mxu0 0.0
    %237 = vmatprep.subr.mxu0 0.0
    %238 = vmatpush2.msra.mxu0 0.0
    %239 = vmatprep.subr.mxu0 0.0
    %240 = vmatpush2.msra.mxu0 0.0
    %241 = vmatprep.subr.mxu0 0.0
    %242 = vmatpush2.msra.mxu0 0.0
    %243 = vmatprep.subr.mxu0 0.0
    %244 = vmatpush2.msra.mxu0 0.0
    %245 = vmatprep.subr.mxu0 0.0
    %246 = vmatpush2.msra.mxu0 0.0
    %247 = vmatprep.subr.mxu0 0.0
    %248 = vmatpush2.msra.mxu0 0.0
    %249 = vmatprep.subr.mxu0 0.0
    %250 = vmatpush2.msra.mxu0 0.0
    %251 = vmatprep.subr.mxu0 0.0
    %252 = vmatpush2.msra.mxu0 0.0
    %253 = vmatprep.subr.mxu0 0.0
    %254 = vmatpush2.msra.mxu0 0.0
    %255 = vmatprep.subr.mxu0 0.0
    %256 = vmatpush2.msra.mxu0 0.0
    %257 = vmatprep.subr.mxu0 0.0
    %258 = vmatpush2.msra.mxu0 0.0
    %259 = vmatprep.subr.mxu0 0.0
    %260 = vmatpush2.msra.mxu0 0.0
    %261 = vmatprep.subr.mxu0 0.0
    %262 = vmatpush2.msra.mxu0 0.0
    %263 = vmatprep.mubr.f32.mxu0 0.0
    %264 = vmatmul.mubr.f32.gmra.mxu0 %v197
    %v265 = vpop.f32.mrf.mxu0
    %v266 = vadd.f32 0.0, %v265
    %v267 = vpop.f32.mrf.mxu0
    %268 = vdwg.mxu0
    %vm269 = vcmask 130048
    %v271 = vsel %vm269, %v178, 0
    %273 = vmatprep.subr.mxu0 0.0
    %274 = vmatpush1.msra.mxu0 0.0
    %275 = vmatprep.subr.mxu0 0.0
    %276 = vmatpush1.msra.mxu0 0.0
    %277 = vmatprep.subr.mxu0 0.0
    %278 = vmatpush1.msra.mxu0 0.0
    %279 = vmatprep.subr.mxu0 0.0
    %280 = vmatpush1.msra.mxu0 0.0
    %281 = vmatprep.subr.mxu0 0.0
    %282 = vmatpush1.msra.mxu0 0.0
    %283 = vmatprep.subr.mxu0 0.0
    %284 = vmatpush1.msra.mxu0 0.0
    %285 = vmatprep.subr.mxu0 0.0
    %286 = vmatpush1.msra.mxu0 0.0
    %287 = vmatprep.subr.mxu0 0.0
    %288 = vmatpush1.msra.mxu0 0.0
    %289 = vmatprep.subr.mxu0 0.0
    %290 = vmatpush1.msra.mxu0 0.0
    %291 = vmatprep.subr.mxu0 0.0
    %292 = vmatpush1.msra.mxu0 0.0
    %293 = vmatprep.subr.mxu0 0.0
    %294 = vmatpush1.msra.mxu0 0.0
    %295 = vmatprep.subr.mxu0 0.0
    %296 = vmatpush1.msra.mxu0 0.0
    %297 = vmatprep.subr.mxu0 0.0
    %298 = vmatpush1.msra.mxu0 0.0
    %299 = vmatprep.subr.mxu0 0.0
    %300 = vmatpush1.msra.mxu0 0.0
    %301 = vmatprep.subr.mxu0 0.0
    %302 = vmatpush1.msra.mxu0 %v190
    %303 = vmatprep.subr.mxu0 0.0
    %304 = vmatpush1.msra.mxu0 %v189
    %305 = vmatprep.subr.mxu0 0.0
    %306 = vmatpush2.msra.mxu0 0.0
    %307 = vmatprep.subr.mxu0 0.0
    %308 = vmatpush2.msra.mxu0 0.0
    %309 = vmatprep.subr.mxu0 0.0
    %310 = vmatpush2.msra.mxu0 0.0
    %311 = vmatprep.subr.mxu0 0.0
    %312 = vmatpush2.msra.mxu0 0.0
    %313 = vmatprep.subr.mxu0 0.0
    %314 = vmatpush2.msra.mxu0 0.0
    %315 = vmatprep.subr.mxu0 0.0
    %316 = vmatpush2.msra.mxu0 0.0
    %317 = vmatprep.subr.mxu0 0.0
    %318 = vmatpush2.msra.mxu0 0.0
    %319 = vmatprep.subr.mxu0 0.0
    %320 = vmatpush2.msra.mxu0 0.0
    %321 = vmatprep.subr.mxu0 0.0
    %322 = vmatpush2.msra.mxu0 0.0
    %323 = vmatprep.subr.mxu0 0.0
    %324 = vmatpush2.msra.mxu0 0.0
    %325 = vmatprep.subr.mxu0 0.0
    %326 = vmatpush2.msra.mxu0 0.0
    %327 = vmatprep.subr.mxu0 0.0
    %328 = vmatpush2.msra.mxu0 0.0
    %329 = vmatprep.subr.mxu0 0.0
    %330 = vmatpush2.msra.mxu0 0.0
    %331 = vmatprep.subr.mxu0 0.0
    %332 = vmatpush2.msra.mxu0 0.0
    %333 = vmatprep.subr.mxu0 0.0
    %334 = vmatpush2.msra.mxu0 0.0
    %335 = vmatprep.subr.mxu0 0.0
    %336 = vmatpush2.msra.mxu0 0.0
    %337 = vmatprep.mubr.f32.mxu0 0.0
    %338 = vmatmul.mubr.f32.gmra.mxu0 %v271
    %v339 = vpop.f32.mrf.mxu0
    %v340 = vadd.f32 %v266, %v339
    %v341 = vpop.f32.mrf.mxu0
    %342 = vdwg.mxu0
    %v343 = vld [vmem:[#allocation7] sm:$0x1]
    %v345 = vlaneseq
    %v346 = vshrl.u32 %v345, 7
    %v347 = vsub.s32 0, %v346
    %v348 = vrot.slane %v343, %v347
    %v350 = vadd.f32 %v340, %v348
    %v351 = vxor.u32 %v350, 2147483648
    %v352 = vmul.f32 %v351, 1.442695
    %v353 = vpow.pop %v352
    %v354 = vadd.f32 %v353, 1.0
    %v355 = vrcp.pop %v354
    %v356 = vmul.f32 1.0, %v355
    %v357 = vld [vmem:[#allocation4] sm:$0xff]
    %v358 = vld [vmem:[#allocation4 + $0x8] sm:$0xff]
    %v359 = vld [vmem:[%s8] sm:$0xff]
    %v360 = vld [vmem:[%s8 + $0x8] sm:$0xff]
    %v361 = vld [vmem:[%s8 + $0x10] sm:$0xff]
    %v362 = vld [vmem:[%s8 + $0x18] sm:$0xff]
    %363 = vmatprep.subr.mxu0 0.0
    %364 = vmatpush1.msra.mxu0 0.0
    %365 = vmatprep.subr.mxu0 0.0
    %366 = vmatpush1.msra.mxu0 0.0
    %367 = vmatprep.subr.mxu0 0.0
    %368 = vmatpush1.msra.mxu0 0.0
    %369 = vmatprep.subr.mxu0 0.0
    %370 = vmatpush1.msra.mxu0 0.0
    %371 = vmatprep.subr.mxu0 0.0
    %372 = vmatpush1.msra.mxu0 0.0
    %373 = vmatprep.subr.mxu0 0.0
    %374 = vmatpush1.msra.mxu0 0.0
    %375 = vmatprep.subr.mxu0 0.0
    %376 = vmatpush1.msra.mxu0 0.0
    %377 = vmatprep.subr.mxu0 0.0
    %378 = vmatpush1.msra.mxu0 0.0
    %379 = vmatprep.subr.mxu0 0.0
    %380 = vmatpush1.msra.mxu0 0.0
    %381 = vmatprep.subr.mxu0 0.0
    %382 = vmatpush1.msra.mxu0 0.0
    %383 = vmatprep.subr.mxu0 0.0
    %384 = vmatpush1.msra.mxu0 0.0
    %385 = vmatprep.subr.mxu0 0.0
    %386 = vmatpush1.msra.mxu0 0.0
    %387 = vmatprep.subr.mxu0 0.0
    %388 = vmatpush1.msra.mxu0 %v362
    %389 = vmatprep.subr.mxu0 0.0
    %390 = vmatpush1.msra.mxu0 %v361
    %391 = vmatprep.subr.mxu0 0.0
    %392 = vmatpush1.msra.mxu0 %v360
    %393 = vmatprep.subr.mxu0 0.0
    %394 = vmatpush1.msra.mxu0 %v359
    %395 = vmatprep.subr.mxu0 0.0
    %396 = vmatpush2.msra.mxu0 0.0
    %397 = vmatprep.subr.mxu0 0.0
    %398 = vmatpush2.msra.mxu0 0.0
    %399 = vmatprep.subr.mxu0 0.0
    %400 = vmatpush2.msra.mxu0 0.0
    %401 = vmatprep.subr.mxu0 0.0
    %402 = vmatpush2.msra.mxu0 0.0
    %403 = vmatprep.subr.mxu0 0.0
    %404 = vmatpush2.msra.mxu0 0.0
    %405 = vmatprep.subr.mxu0 0.0
    %406 = vmatpush2.msra.mxu0 0.0
    %407 = vmatprep.subr.mxu0 0.0
    %408 = vmatpush2.msra.mxu0 0.0
    %409 = vmatprep.subr.mxu0 0.0
    %410 = vmatpush2.msra.mxu0 0.0
    %411 = vmatprep.subr.mxu0 0.0
    %412 = vmatpush2.msra.mxu0 0.0
    %413 = vmatprep.subr.mxu0 0.0
    %414 = vmatpush2.msra.mxu0 0.0
    %415 = vmatprep.subr.mxu0 0.0
    %416 = vmatpush2.msra.mxu0 0.0
    %417 = vmatprep.subr.mxu0 0.0
    %418 = vmatpush2.msra.mxu0 0.0
    %419 = vmatprep.subr.mxu0 0.0
    %420 = vmatpush2.msra.mxu0 0.0
    %421 = vmatprep.subr.mxu0 0.0
    %422 = vmatpush2.msra.mxu0 0.0
    %423 = vmatprep.subr.mxu0 0.0
    %424 = vmatpush2.msra.mxu0 0.0
    %425 = vmatprep.subr.mxu0 0.0
    %426 = vmatpush2.msra.mxu0 0.0
    %427 = vmatprep.mubr.f32.mxu0 0.0
    %428 = vmatmul.mubr.f32.gmra.mxu0 %v197
    %v429 = vpop.f32.mrf.mxu0
    %v430 = vadd.f32 0.0, %v429
    %v431 = vpop.f32.mrf.mxu0
    %432 = vdwg.mxu0
    %433 = vmatprep.subr.mxu0 0.0
    %434 = vmatpush1.msra.mxu0 0.0
    %435 = vmatprep.subr.mxu0 0.0
    %436 = vmatpush1.msra.mxu0 0.0
    %437 = vmatprep.subr.mxu0 0.0
    %438 = vmatpush1.msra.mxu0 0.0
    %439 = vmatprep.subr.mxu0 0.0
    %440 = vmatpush1.msra.mxu0 0.0
    %441 = vmatprep.subr.mxu0 0.0
    %442 = vmatpush1.msra.mxu0 0.0
    %443 = vmatprep.subr.mxu0 0.0
    %444 = vmatpush1.msra.mxu0 0.0
    %445 = vmatprep.subr.mxu0 0.0
    %446 = vmatpush1.msra.mxu0 0.0
    %447 = vmatprep.subr.mxu0 0.0
    %448 = vmatpush1.msra.mxu0 0.0
    %449 = vmatprep.subr.mxu0 0.0
    %450 = vmatpush1.msra.mxu0 0.0
    %451 = vmatprep.subr.mxu0 0.0
    %452 = vmatpush1.msra.mxu0 0.0
    %453 = vmatprep.subr.mxu0 0.0
    %454 = vmatpush1.msra.mxu0 0.0
    %455 = vmatprep.subr.mxu0 0.0
    %456 = vmatpush1.msra.mxu0 0.0
    %457 = vmatprep.subr.mxu0 0.0
    %458 = vmatpush1.msra.mxu0 0.0
    %459 = vmatprep.subr.mxu0 0.0
    %460 = vmatpush1.msra.mxu0 0.0
    %461 = vmatprep.subr.mxu0 0.0
    %462 = vmatpush1.msra.mxu0 %v358
    %463 = vmatprep.subr.mxu0 0.0
    %464 = vmatpush1.msra.mxu0 %v357
    %465 = vmatprep.subr.mxu0 0.0
    %466 = vmatpush2.msra.mxu0 0.0
    %467 = vmatprep.subr.mxu0 0.0
    %468 = vmatpush2.msra.mxu0 0.0
    %469 = vmatprep.subr.mxu0 0.0
    %470 = vmatpush2.msra.mxu0 0.0
    %471 = vmatprep.subr.mxu0 0.0
    %472 = vmatpush2.msra.mxu0 0.0
    %473 = vmatprep.subr.mxu0 0.0
    %474 = vmatpush2.msra.mxu0 0.0
    %475 = vmatprep.subr.mxu0 0.0
    %476 = vmatpush2.msra.mxu0 0.0
    %477 = vmatprep.subr.mxu0 0.0
    %478 = vmatpush2.msra.mxu0 0.0
    %479 = vmatprep.subr.mxu0 0.0
    %480 = vmatpush2.msra.mxu0 0.0
    %481 = vmatprep.subr.mxu0 0.0
    %482 = vmatpush2.msra.mxu0 0.0
    %483 = vmatprep.subr.mxu0 0.0
    %484 = vmatpush2.msra.mxu0 0.0
    %485 = vmatprep.subr.mxu0 0.0
    %486 = vmatpush2.msra.mxu0 0.0
    %487 = vmatprep.subr.mxu0 0.0
    %488 = vmatpush2.msra.mxu0 0.0
    %489 = vmatprep.subr.mxu0 0.0
    %490 = vmatpush2.msra.mxu0 0.0
    %491 = vmatprep.subr.mxu0 0.0
    %492 = vmatpush2.msra.mxu0 0.0
    %493 = vmatprep.subr.mxu0 0.0
    %494 = vmatpush2.msra.mxu0 0.0
    %495 = vmatprep.subr.mxu0 0.0
    %496 = vmatpush2.msra.mxu0 0.0
    %497 = vmatprep.mubr.f32.mxu0 0.0
    %498 = vmatmul.mubr.f32.gmra.mxu0 %v271
    %v499 = vpop.f32.mrf.mxu0
    %v500 = vadd.f32 %v430, %v499
    %v501 = vpop.f32.mrf.mxu0
    %502 = vdwg.mxu0
    %v503 = vld [vmem:[#allocation9] sm:$0x1]
    %v505 = vlaneseq
    %v506 = vshrl.u32 %v505, 7
    %v507 = vsub.s32 0, %v506
    %v508 = vrot.slane %v503, %v507
    %v510 = vadd.f32 %v500, %v508
    %v511 = vxor.u32 %v510, 2147483648
    %v512 = vmul.f32 %v511, 1.442695
    %v513 = vpow.pop %v512
    %v514 = vadd.f32 %v513, 1.0
    %v515 = vrcp.pop %v514
    %v516 = vmul.f32 1.0, %v515
    %v517 = vld [vmem:[#allocation6] sm:$0xff]
    %v518 = vld [vmem:[#allocation6 + $0x8] sm:$0xff]
    %v519 = vld [vmem:[#allocation10] sm:$0x1]
    %v521 = vlaneseq
    %v522 = vshrl.u32 %v521, 7
    %v523 = vsub.s32 0, %v522
    %v524 = vrot.slane %v519, %v523
    %526 = vmatprep.subr.mxu0 0.0
    %527 = vmatpush1.msra.mxu0 0.0
    %528 = vmatprep.subr.mxu0 0.0
    %529 = vmatpush1.msra.mxu0 0.0
    %530 = vmatprep.subr.mxu0 0.0
    %531 = vmatpush1.msra.mxu0 0.0
    %532 = vmatprep.subr.mxu0 0.0
    %533 = vmatpush1.msra.mxu0 0.0
    %534 = vmatprep.subr.mxu0 0.0
    %535 = vmatpush1.msra.mxu0 0.0
    %536 = vmatprep.subr.mxu0 0.0
    %537 = vmatpush1.msra.mxu0 0.0
    %538 = vmatprep.subr.mxu0 0.0
    %539 = vmatpush1.msra.mxu0 0.0
    %540 = vmatprep.subr.mxu0 0.0
    %541 = vmatpush1.msra.mxu0 0.0
    %542 = vmatprep.subr.mxu0 0.0
    %543 = vmatpush1.msra.mxu0 0.0
    %544 = vmatprep.subr.mxu0 0.0
    %545 = vmatpush1.msra.mxu0 0.0
    %546 = vmatprep.subr.mxu0 0.0
    %547 = vmatpush1.msra.mxu0 0.0
    %548 = vmatprep.subr.mxu0 0.0
    %549 = vmatpush1.msra.mxu0 0.0
    %550 = vmatprep.subr.mxu0 0.0
    %551 = vmatpush1.msra.mxu0 0.0
    %552 = vmatprep.subr.mxu0 0.0
    %553 = vmatpush1.msra.mxu0 0.0
    %554 = vmatprep.subr.mxu0 0.0
    %555 = vmatpush1.msra.mxu0 %v518
    %556 = vmatprep.subr.mxu0 0.0
    %557 = vmatpush1.msra.mxu0 %v517
    %558 = vmatprep.subr.mxu0 0.0
    %559 = vmatpush2.msra.mxu0 0.0
    %560 = vmatprep.subr.mxu0 0.0
    %561 = vmatpush2.msra.mxu0 0.0
    %562 = vmatprep.subr.mxu0 0.0
    %563 = vmatpush2.msra.mxu0 0.0
    %564 = vmatprep.subr.mxu0 0.0
    %565 = vmatpush2.msra.mxu0 0.0
    %566 = vmatprep.subr.mxu0 0.0
    %567 = vmatpush2.msra.mxu0 0.0
    %568 = vmatprep.subr.mxu0 0.0
    %569 = vmatpush2.msra.mxu0 0.0
    %570 = vmatprep.subr.mxu0 0.0
    %571 = vmatpush2.msra.mxu0 0.0
    %572 = vmatprep.subr.mxu0 0.0
    %573 = vmatpush2.msra.mxu0 0.0
    %574 = vmatprep.subr.mxu0 0.0
    %575 = vmatpush2.msra.mxu0 0.0
    %576 = vmatprep.subr.mxu0 0.0
    %577 = vmatpush2.msra.mxu0 0.0
    %578 = vmatprep.subr.mxu0 0.0
    %579 = vmatpush2.msra.mxu0 0.0
    %580 = vmatprep.subr.mxu0 0.0
    %581 = vmatpush2.msra.mxu0 0.0
    %582 = vmatprep.subr.mxu0 0.0
    %583 = vmatpush2.msra.mxu0 0.0
    %584 = vmatprep.subr.mxu0 0.0
    %585 = vmatpush2.msra.mxu0 0.0
    %586 = vmatprep.subr.mxu0 0.0
    %587 = vmatpush2.msra.mxu0 0.0
    %588 = vmatprep.subr.mxu0 0.0
    %589 = vmatpush2.msra.mxu0 0.0
    %590 = vmatprep.mubr.f32.mxu0 0.0
    %591 = vmatmul.mubr.f32.gmra.mxu0 %v271
    %v592 = vpop.f32.mrf.mxu0
    %v593 = vadd.f32 %v524, %v592
    %v594 = vpop.f32.mrf.mxu0
    %595 = vdwg.mxu0
    %v596 = vld [vmem:[%s9] sm:$0xff]
    %v597 = vld [vmem:[%s9 + $0x8] sm:$0xff]
    %v598 = vld [vmem:[%s9 + $0x10] sm:$0xff]
    %v599 = vld [vmem:[%s9 + $0x18] sm:$0xff]
    %v600 = vld [vmem:[#allocation12] sm:$0x1]
    %v602 = vlaneseq
    %v603 = vshrl.u32 %v602, 7
    %v604 = vsub.s32 0, %v603
    %v605 = vrot.slane %v600, %v604
    %607 = vmatprep.subr.mxu0 0.0
    %608 = vmatpush1.msra.mxu0 0.0
    %609 = vmatprep.subr.mxu0 0.0
    %610 = vmatpush1.msra.mxu0 0.0
    %611 = vmatprep.subr.mxu0 0.0
    %612 = vmatpush1.msra.mxu0 0.0
    %613 = vmatprep.subr.mxu0 0.0
    %614 = vmatpush1.msra.mxu0 0.0
    %615 = vmatprep.subr.mxu0 0.0
    %616 = vmatpush1.msra.mxu0 0.0
    %617 = vmatprep.subr.mxu0 0.0
    %618 = vmatpush1.msra.mxu0 0.0
    %619 = vmatprep.subr.mxu0 0.0
    %620 = vmatpush1.msra.mxu0 0.0
    %621 = vmatprep.subr.mxu0 0.0
    %622 = vmatpush1.msra.mxu0 0.0
    %623 = vmatprep.subr.mxu0 0.0
    %624 = vmatpush1.msra.mxu0 0.0
    %625 = vmatprep.subr.mxu0 0.0
    %626 = vmatpush1.msra.mxu0 0.0
    %627 = vmatprep.subr.mxu0 0.0
    %628 = vmatpush1.msra.mxu0 0.0
    %629 = vmatprep.subr.mxu0 0.0
    %630 = vmatpush1.msra.mxu0 0.0
    %631 = vmatprep.subr.mxu0 0.0
    %632 = vmatpush1.msra.mxu0 %v599
    %633 = vmatprep.subr.mxu0 0.0
    %634 = vmatpush1.msra.mxu0 %v598
    %635 = vmatprep.subr.mxu0 0.0
    %636 = vmatpush1.msra.mxu0 %v597
    %637 = vmatprep.subr.mxu0 0.0
    %638 = vmatpush1.msra.mxu0 %v596
    %639 = vmatprep.subr.mxu0 0.0
    %640 = vmatpush2.msra.mxu0 0.0
    %641 = vmatprep.subr.mxu0 0.0
    %642 = vmatpush2.msra.mxu0 0.0
    %643 = vmatprep.subr.mxu0 0.0
    %644 = vmatpush2.msra.mxu0 0.0
    %645 = vmatprep.subr.mxu0 0.0
    %646 = vmatpush2.msra.mxu0 0.0
    %647 = vmatprep.subr.mxu0 0.0
    %648 = vmatpush2.msra.mxu0 0.0
    %649 = vmatprep.subr.mxu0 0.0
    %650 = vmatpush2.msra.mxu0 0.0
    %651 = vmatprep.subr.mxu0 0.0
    %652 = vmatpush2.msra.mxu0 0.0
    %653 = vmatprep.subr.mxu0 0.0
    %654 = vmatpush2.msra.mxu0 0.0
    %655 = vmatprep.subr.mxu0 0.0
    %656 = vmatpush2.msra.mxu0 0.0
    %657 = vmatprep.subr.mxu0 0.0
    %658 = vmatpush2.msra.mxu0 0.0
    %659 = vmatprep.subr.mxu0 0.0
    %660 = vmatpush2.msra.mxu0 0.0
    %661 = vmatprep.subr.mxu0 0.0
    %662 = vmatpush2.msra.mxu0 0.0
    %663 = vmatprep.subr.mxu0 0.0
    %664 = vmatpush2.msra.mxu0 0.0
    %665 = vmatprep.subr.mxu0 0.0
    %666 = vmatpush2.msra.mxu0 0.0
    %667 = vmatprep.subr.mxu0 0.0
    %668 = vmatpush2.msra.mxu0 0.0
    %669 = vmatprep.subr.mxu0 0.0
    %670 = vmatpush2.msra.mxu0 0.0
    %671 = vmatprep.mubr.f32.mxu0 0.0
    %672 = vmatmul.mubr.f32.gmra.mxu0 %v197
    %v673 = vpop.f32.mrf.mxu0
    %v674 = vadd.f32 %v605, %v673
    %v675 = vpop.f32.mrf.mxu0
    %676 = vdwg.mxu0
    %v677 = vmul.f32 %v356, %v674
    %v678 = vadd.f32 %v593, %v677
    %v679 = vtanh.pop %v678
    %v680 = vsub.f32 1.0, %v516
    %v681 = vmul.f32 %v680, %v679
    %v682 = vmul.f32 %v516, %v179
    %v683 = vadd.f32 %v681, %v682
    %v685 = vcombine.high %v683, %v683
    %v687 = vunpack.c.l.s4 1966171168
    %v688 = vunpack.c.0.s8 %v687
    %v689 = vlaneseq
    %v690 = vshrl.u32 %v689, 7
    %v691 = vsub.s32 %v688, %v690
    %v692 = vrot.slane %v683, %v691
    %v694 = vunpack.c.l.s4 1966171168
    %v695 = vunpack.c.0.s8 %v694
    %v696 = vlaneseq
    %v697 = vshrl.u32 %v696, 7
    %v698 = vsub.s32 %v695, %v697
    %v699 = vrot.slane %v685, %v698
    %v700 = vcombine.high %v692, %v692
    %v701 = vcombine.high %v699, %v699
    %v703 = vunpack.c.l.s4 1966171168
    %v704 = vunpack.c.0.s8 %v703
    %v705 = vlaneseq
    %v706 = vshrl.u32 %v705, 7
    %v707 = vsub.s32 %v704, %v706
    %v708 = vrot.slane %v692, %v707
    %v710 = vunpack.c.l.s4 1966171168
    %v711 = vunpack.c.0.s8 %v710
    %v712 = vlaneseq
    %v713 = vshrl.u32 %v712, 7
    %v714 = vsub.s32 %v711, %v713
    %v715 = vrot.slane %v699, %v714
    %v717 = vunpack.c.l.s4 1966171168
    %v718 = vunpack.c.0.s8 %v717
    %v719 = vlaneseq
    %v720 = vshrl.u32 %v719, 7
    %v721 = vsub.s32 %v718, %v720
    %v722 = vrot.slane %v700, %v721
    %v724 = vunpack.c.l.s4 1966171168
    %v725 = vunpack.c.0.s8 %v724
    %v726 = vlaneseq
    %v727 = vshrl.u32 %v726, 7
    %v728 = vsub.s32 %v725, %v727
    %v729 = vrot.slane %v701, %v728
    %v730 = vcombine.high %v708, %v708
    %v731 = vcombine.high %v715, %v715
    %v732 = vcombine.high %v722, %v722
    %v733 = vcombine.high %v729, %v729
    %v734 = vsel %vm195, %v708, 0
    %v737 = vsel %vm195, %v180, 0
    %739 = vmatprep.subr.mxu0 0.0
    %740 = vmatpush1.xpose.msra.mxu0 0.0
    %741 = vmatprep.subr.mxu0 0.0
    %742 = vmatpush1.xpose.msra.mxu0 0.0
    %743 = vmatprep.subr.mxu0 0.0
    %744 = vmatpush1.xpose.msra.mxu0 0.0
    %745 = vmatprep.subr.mxu0 0.0
    %746 = vmatpush1.xpose.msra.mxu0 0.0
    %747 = vmatprep.subr.mxu0 0.0
    %748 = vmatpush1.xpose.msra.mxu0 0.0
    %749 = vmatprep.subr.mxu0 0.0
    %750 = vmatpush1.xpose.msra.mxu0 0.0
    %751 = vmatprep.subr.mxu0 0.0
    %752 = vmatpush1.xpose.msra.mxu0 0.0
    %753 = vmatprep.subr.mxu0 0.0
    %754 = vmatpush1.xpose.msra.mxu0 0.0
    %755 = vmatprep.subr.mxu0 0.0
    %756 = vmatpush1.xpose.msra.mxu0 0.0
    %757 = vmatprep.subr.mxu0 0.0
    %758 = vmatpush1.xpose.msra.mxu0 0.0
    %759 = vmatprep.subr.mxu0 0.0
    %760 = vmatpush1.xpose.msra.mxu0 0.0
    %761 = vmatprep.subr.mxu0 0.0
    %762 = vmatpush1.xpose.msra.mxu0 0.0
    %763 = vmatprep.subr.mxu0 0.0
    %764 = vmatpush1.xpose.msra.mxu0 0.0
    %765 = vmatprep.subr.mxu0 0.0
    %766 = vmatpush1.xpose.msra.mxu0 0.0
    %767 = vmatprep.subr.mxu0 0.0
    %768 = vmatpush1.xpose.msra.mxu0 0.0
    %769 = vmatprep.subr.mxu0 0.0
    %770 = vmatpush1.xpose.msra.mxu0 %v737
    %771 = vmatprep.subr.mxu0 0.0
    %772 = vmatpush2.xpose.msra.mxu0 0.0
    %773 = vmatprep.subr.mxu0 0.0
    %774 = vmatpush2.xpose.msra.mxu0 0.0
    %775 = vmatprep.subr.mxu0 0.0
    %776 = vmatpush2.xpose.msra.mxu0 0.0
    %777 = vmatprep.subr.mxu0 0.0
    %778 = vmatpush2.xpose.msra.mxu0 0.0
    %779 = vmatprep.subr.mxu0 0.0
    %780 = vmatpush2.xpose.msra.mxu0 0.0
    %781 = vmatprep.subr.mxu0 0.0
    %782 = vmatpush2.xpose.msra.mxu0 0.0
    %783 = vmatprep.subr.mxu0 0.0
    %784 = vmatpush2.xpose.msra.mxu0 0.0
    %785 = vmatprep.subr.mxu0 0.0
    %786 = vmatpush2.xpose.msra.mxu0 0.0
    %787 = vmatprep.subr.mxu0 0.0
    %788 = vmatpush2.xpose.msra.mxu0 0.0
    %789 = vmatprep.subr.mxu0 0.0
    %790 = vmatpush2.xpose.msra.mxu0 0.0
    %791 = vmatprep.subr.mxu0 0.0
    %792 = vmatpush2.xpose.msra.mxu0 0.0
    %793 = vmatprep.subr.mxu0 0.0
    %794 = vmatpush2.xpose.msra.mxu0 0.0
    %795 = vmatprep.subr.mxu0 0.0
    %796 = vmatpush2.xpose.msra.mxu0 0.0
    %797 = vmatprep.subr.mxu0 0.0
    %798 = vmatpush2.xpose.msra.mxu0 0.0
    %799 = vmatprep.subr.mxu0 0.0
    %800 = vmatpush2.xpose.msra.mxu0 0.0
    %801 = vmatprep.subr.mxu0 0.0
    %802 = vmatpush2.xpose.msra.mxu0 0.0
    %803 = vmatprep.mubr.f32.mxu0 0.0
    %804 = vmatmul.mubr.f32.gmra.mxu0 %v734
    %v805 = vpop.f32.mrf.mxu0
    %v806 = vadd.f32 0.0, %v805
    %v807 = vpop.f32.mrf.mxu0
    %808 = vdwg.mxu0
    %v809 = vsel %vm195, %v722, 0
    %v812 = vsel %vm195, %v181, 0
    %814 = vmatprep.subr.mxu0 0.0
    %815 = vmatpush1.xpose.msra.mxu0 0.0
    %816 = vmatprep.subr.mxu0 0.0
    %817 = vmatpush1.xpose.msra.mxu0 0.0
    %818 = vmatprep.subr.mxu0 0.0
    %819 = vmatpush1.xpose.msra.mxu0 0.0
    %820 = vmatprep.subr.mxu0 0.0
    %821 = vmatpush1.xpose.msra.mxu0 0.0
    %822 = vmatprep.subr.mxu0 0.0
    %823 = vmatpush1.xpose.msra.mxu0 0.0
    %824 = vmatprep.subr.mxu0 0.0
    %825 = vmatpush1.xpose.msra.mxu0 0.0
    %826 = vmatprep.subr.mxu0 0.0
    %827 = vmatpush1.xpose.msra.mxu0 0.0
    %828 = vmatprep.subr.mxu0 0.0
    %829 = vmatpush1.xpose.msra.mxu0 0.0
    %830 = vmatprep.subr.mxu0 0.0
    %831 = vmatpush1.xpose.msra.mxu0 0.0
    %832 = vmatprep.subr.mxu0 0.0
    %833 = vmatpush1.xpose.msra.mxu0 0.0
    %834 = vmatprep.subr.mxu0 0.0
    %835 = vmatpush1.xpose.msra.mxu0 0.0
    %836 = vmatprep.subr.mxu0 0.0
    %837 = vmatpush1.xpose.msra.mxu0 0.0
    %838 = vmatprep.subr.mxu0 0.0
    %839 = vmatpush1.xpose.msra.mxu0 0.0
    %840 = vmatprep.subr.mxu0 0.0
    %841 = vmatpush1.xpose.msra.mxu0 0.0
    %842 = vmatprep.subr.mxu0 0.0
    %843 = vmatpush1.xpose.msra.mxu0 0.0
    %844 = vmatprep.subr.mxu0 0.0
    %845 = vmatpush1.xpose.msra.mxu0 %v812
    %846 = vmatprep.subr.mxu0 0.0
    %847 = vmatpush2.xpose.msra.mxu0 0.0
    %848 = vmatprep.subr.mxu0 0.0
    %849 = vmatpush2.xpose.msra.mxu0 0.0
    %850 = vmatprep.subr.mxu0 0.0
    %851 = vmatpush2.xpose.msra.mxu0 0.0
    %852 = vmatprep.subr.mxu0 0.0
    %853 = vmatpush2.xpose.msra.mxu0 0.0
    %854 = vmatprep.subr.mxu0 0.0
    %855 = vmatpush2.xpose.msra.mxu0 0.0
    %856 = vmatprep.subr.mxu0 0.0
    %857 = vmatpush2.xpose.msra.mxu0 0.0
    %858 = vmatprep.subr.mxu0 0.0
    %859 = vmatpush2.xpose.msra.mxu0 0.0
    %860 = vmatprep.subr.mxu0 0.0
    %861 = vmatpush2.xpose.msra.mxu0 0.0
    %862 = vmatprep.subr.mxu0 0.0
    %863 = vmatpush2.xpose.msra.mxu0 0.0
    %864 = vmatprep.subr.mxu0 0.0
    %865 = vmatpush2.xpose.msra.mxu0 0.0
    %866 = vmatprep.subr.mxu0 0.0
    %867 = vmatpush2.xpose.msra.mxu0 0.0
    %868 = vmatprep.subr.mxu0 0.0
    %869 = vmatpush2.xpose.msra.mxu0 0.0
    %870 = vmatprep.subr.mxu0 0.0
    %871 = vmatpush2.xpose.msra.mxu0 0.0
    %872 = vmatprep.subr.mxu0 0.0
    %873 = vmatpush2.xpose.msra.mxu0 0.0
    %874 = vmatprep.subr.mxu0 0.0
    %875 = vmatpush2.xpose.msra.mxu0 0.0
    %876 = vmatprep.subr.mxu0 0.0
    %877 = vmatpush2.xpose.msra.mxu0 0.0
    %878 = vmatprep.mubr.f32.mxu0 0.0
    %879 = vmatmul.mubr.f32.gmra.mxu0 %v809
    %v880 = vpop.f32.mrf.mxu0
    %v881 = vadd.f32 0.0, %v880
    %v882 = vpop.f32.mrf.mxu0
    %883 = vdwg.mxu0
    %v884 = vsel %vm195, %v730, 0
    %v887 = vsel %vm195, %v182, 0
    %889 = vmatprep.subr.mxu0 0.0
    %890 = vmatpush1.xpose.msra.mxu0 0.0
    %891 = vmatprep.subr.mxu0 0.0
    %892 = vmatpush1.xpose.msra.mxu0 0.0
    %893 = vmatprep.subr.mxu0 0.0
    %894 = vmatpush1.xpose.msra.mxu0 0.0
    %895 = vmatprep.subr.mxu0 0.0
    %896 = vmatpush1.xpose.msra.mxu0 0.0
    %897 = vmatprep.subr.mxu0 0.0
    %898 = vmatpush1.xpose.msra.mxu0 0.0
    %899 = vmatprep.subr.mxu0 0.0
    %900 = vmatpush1.xpose.msra.mxu0 0.0
    %901 = vmatprep.subr.mxu0 0.0
    %902 = vmatpush1.xpose.msra.mxu0 0.0
    %903 = vmatprep.subr.mxu0 0.0
    %904 = vmatpush1.xpose.msra.mxu0 0.0
    %905 = vmatprep.subr.mxu0 0.0
    %906 = vmatpush1.xpose.msra.mxu0 0.0
    %907 = vmatprep.subr.mxu0 0.0
    %908 = vmatpush1.xpose.msra.mxu0 0.0
    %909 = vmatprep.subr.mxu0 0.0
    %910 = vmatpush1.xpose.msra.mxu0 0.0
    %911 = vmatprep.subr.mxu0 0.0
    %912 = vmatpush1.xpose.msra.mxu0 0.0
    %913 = vmatprep.subr.mxu0 0.0
    %914 = vmatpush1.xpose.msra.mxu0 0.0
    %915 = vmatprep.subr.mxu0 0.0
    %916 = vmatpush1.xpose.msra.mxu0 0.0
    %917 = vmatprep.subr.mxu0 0.0
    %918 = vmatpush1.xpose.msra.mxu0 0.0
    %919 = vmatprep.subr.mxu0 0.0
    %920 = vmatpush1.xpose.msra.mxu0 %v887
    %921 = vmatprep.subr.mxu0 0.0
    %922 = vmatpush2.xpose.msra.mxu0 0.0
    %923 = vmatprep.subr.mxu0 0.0
    %924 = vmatpush2.xpose.msra.mxu0 0.0
    %925 = vmatprep.subr.mxu0 0.0
    %926 = vmatpush2.xpose.msra.mxu0 0.0
    %927 = vmatprep.subr.mxu0 0.0
    %928 = vmatpush2.xpose.msra.mxu0 0.0
    %929 = vmatprep.subr.mxu0 0.0
    %930 = vmatpush2.xpose.msra.mxu0 0.0
    %931 = vmatprep.subr.mxu0 0.0
    %932 = vmatpush2.xpose.msra.mxu0 0.0
    %933 = vmatprep.subr.mxu0 0.0
    %934 = vmatpush2.xpose.msra.mxu0 0.0
    %935 = vmatprep.subr.mxu0 0.0
    %936 = vmatpush2.xpose.msra.mxu0 0.0
    %937 = vmatprep.subr.mxu0 0.0
    %938 = vmatpush2.xpose.msra.mxu0 0.0
    %939 = vmatprep.subr.mxu0 0.0
    %940 = vmatpush2.xpose.msra.mxu0 0.0
    %941 = vmatprep.subr.mxu0 0.0
    %942 = vmatpush2.xpose.msra.mxu0 0.0
    %943 = vmatprep.subr.mxu0 0.0
    %944 = vmatpush2.xpose.msra.mxu0 0.0
    %945 = vmatprep.subr.mxu0 0.0
    %946 = vmatpush2.xpose.msra.mxu0 0.0
    %947 = vmatprep.subr.mxu0 0.0
    %948 = vmatpush2.xpose.msra.mxu0 0.0
    %949 = vmatprep.subr.mxu0 0.0
    %950 = vmatpush2.xpose.msra.mxu0 0.0
    %951 = vmatprep.subr.mxu0 0.0
    %952 = vmatpush2.xpose.msra.mxu0 0.0
    %953 = vmatprep.mubr.f32.mxu0 0.0
    %954 = vmatmul.mubr.f32.gmra.mxu0 %v884
    %v955 = vpop.f32.mrf.mxu0
    %v956 = vadd.f32 0.0, %v955
    %v957 = vpop.f32.mrf.mxu0
    %958 = vdwg.mxu0
    %v959 = vsel %vm195, %v732, 0
    %v962 = vsel %vm195, %v183, 0
    %964 = vmatprep.subr.mxu0 0.0
    %965 = vmatpush1.xpose.msra.mxu0 0.0
    %966 = vmatprep.subr.mxu0 0.0
    %967 = vmatpush1.xpose.msra.mxu0 0.0
    %968 = vmatprep.subr.mxu0 0.0
    %969 = vmatpush1.xpose.msra.mxu0 0.0
    %970 = vmatprep.subr.mxu0 0.0
    %971 = vmatpush1.xpose.msra.mxu0 0.0
    %972 = vmatprep.subr.mxu0 0.0
    %973 = vmatpush1.xpose.msra.mxu0 0.0
    %974 = vmatprep.subr.mxu0 0.0
    %975 = vmatpush1.xpose.msra.mxu0 0.0
    %976 = vmatprep.subr.mxu0 0.0
    %977 = vmatpush1.xpose.msra.mxu0 0.0
    %978 = vmatprep.subr.mxu0 0.0
    %979 = vmatpush1.xpose.msra.mxu0 0.0
    %980 = vmatprep.subr.mxu0 0.0
    %981 = vmatpush1.xpose.msra.mxu0 0.0
    %982 = vmatprep.subr.mxu0 0.0
    %983 = vmatpush1.xpose.msra.mxu0 0.0
    %984 = vmatprep.subr.mxu0 0.0
    %985 = vmatpush1.xpose.msra.mxu0 0.0
    %986 = vmatprep.subr.mxu0 0.0
    %987 = vmatpush1.xpose.msra.mxu0 0.0
    %988 = vmatprep.subr.mxu0 0.0
    %989 = vmatpush1.xpose.msra.mxu0 0.0
    %990 = vmatprep.subr.mxu0 0.0
    %991 = vmatpush1.xpose.msra.mxu0 0.0
    %992 = vmatprep.subr.mxu0 0.0
    %993 = vmatpush1.xpose.msra.mxu0 0.0
    %994 = vmatprep.subr.mxu0 0.0
    %995 = vmatpush1.xpose.msra.mxu0 %v962
    %996 = vmatprep.subr.mxu0 0.0
    %997 = vmatpush2.xpose.msra.mxu0 0.0
    %998 = vmatprep.subr.mxu0 0.0
    %999 = vmatpush2.xpose.msra.mxu0 0.0
    %1000 = vmatprep.subr.mxu0 0.0
    %1001 = vmatpush2.xpose.msra.mxu0 0.0
    %1002 = vmatprep.subr.mxu0 0.0
    %1003 = vmatpush2.xpose.msra.mxu0 0.0
    %1004 = vmatprep.subr.mxu0 0.0
    %1005 = vmatpush2.xpose.msra.mxu0 0.0
    %1006 = vmatprep.subr.mxu0 0.0
    %1007 = vmatpush2.xpose.msra.mxu0 0.0
    %1008 = vmatprep.subr.mxu0 0.0
    %1009 = vmatpush2.xpose.msra.mxu0 0.0
    %1010 = vmatprep.subr.mxu0 0.0
    %1011 = vmatpush2.xpose.msra.mxu0 0.0
    %1012 = vmatprep.subr.mxu0 0.0
    %1013 = vmatpush2.xpose.msra.mxu0 0.0
    %1014 = vmatprep.subr.mxu0 0.0
    %1015 = vmatpush2.xpose.msra.mxu0 0.0
    %1016 = vmatprep.subr.mxu0 0.0
    %1017 = vmatpush2.xpose.msra.mxu0 0.0
    %1018 = vmatprep.subr.mxu0 0.0
    %1019 = vmatpush2.xpose.msra.mxu0 0.0
    %1020 = vmatprep.subr.mxu0 0.0
    %1021 = vmatpush2.xpose.msra.mxu0 0.0
    %1022 = vmatprep.subr.mxu0 0.0
    %1023 = vmatpush2.xpose.msra.mxu0 0.0
    %1024 = vmatprep.subr.mxu0 0.0
    %1025 = vmatpush2.xpose.msra.mxu0 0.0
    %1026 = vmatprep.subr.mxu0 0.0
    %1027 = vmatpush2.xpose.msra.mxu0 0.0
    %1028 = vmatprep.mubr.f32.mxu0 0.0
    %1029 = vmatmul.mubr.f32.gmra.mxu0 %v959
    %v1030 = vpop.f32.mrf.mxu0
    %v1031 = vadd.f32 0.0, %v1030
    %v1032 = vpop.f32.mrf.mxu0
    %1033 = vdwg.mxu0
    %v1034 = vsel %vm195, %v715, 0
    %v1037 = vsel %vm195, %v184, 0
    %1039 = vmatprep.subr.mxu0 0.0
    %1040 = vmatpush1.xpose.msra.mxu0 0.0
    %1041 = vmatprep.subr.mxu0 0.0
    %1042 = vmatpush1.xpose.msra.mxu0 0.0
    %1043 = vmatprep.subr.mxu0 0.0
    %1044 = vmatpush1.xpose.msra.mxu0 0.0
    %1045 = vmatprep.subr.mxu0 0.0
    %1046 = vmatpush1.xpose.msra.mxu0 0.0
    %1047 = vmatprep.subr.mxu0 0.0
    %1048 = vmatpush1.xpose.msra.mxu0 0.0
    %1049 = vmatprep.subr.mxu0 0.0
    %1050 = vmatpush1.xpose.msra.mxu0 0.0
    %1051 = vmatprep.subr.mxu0 0.0
    %1052 = vmatpush1.xpose.msra.mxu0 0.0
    %1053 = vmatprep.subr.mxu0 0.0
    %1054 = vmatpush1.xpose.msra.mxu0 0.0
    %1055 = vmatprep.subr.mxu0 0.0
    %1056 = vmatpush1.xpose.msra.mxu0 0.0
    %1057 = vmatprep.subr.mxu0 0.0
    %1058 = vmatpush1.xpose.msra.mxu0 0.0
    %1059 = vmatprep.subr.mxu0 0.0
    %1060 = vmatpush1.xpose.msra.mxu0 0.0
    %1061 = vmatprep.subr.mxu0 0.0
    %1062 = vmatpush1.xpose.msra.mxu0 0.0
    %1063 = vmatprep.subr.mxu0 0.0
    %1064 = vmatpush1.xpose.msra.mxu0 0.0
    %1065 = vmatprep.subr.mxu0 0.0
    %1066 = vmatpush1.xpose.msra.mxu0 0.0
    %1067 = vmatprep.subr.mxu0 0.0
    %1068 = vmatpush1.xpose.msra.mxu0 0.0
    %1069 = vmatprep.subr.mxu0 0.0
    %1070 = vmatpush1.xpose.msra.mxu0 %v1037
    %1071 = vmatprep.subr.mxu0 0.0
    %1072 = vmatpush2.xpose.msra.mxu0 0.0
    %1073 = vmatprep.subr.mxu0 0.0
    %1074 = vmatpush2.xpose.msra.mxu0 0.0
    %1075 = vmatprep.subr.mxu0 0.0
    %1076 = vmatpush2.xpose.msra.mxu0 0.0
    %1077 = vmatprep.subr.mxu0 0.0
    %1078 = vmatpush2.xpose.msra.mxu0 0.0
    %1079 = vmatprep.subr.mxu0 0.0
    %1080 = vmatpush2.xpose.msra.mxu0 0.0
    %1081 = vmatprep.subr.mxu0 0.0
    %1082 = vmatpush2.xpose.msra.mxu0 0.0
    %1083 = vmatprep.subr.mxu0 0.0
    %1084 = vmatpush2.xpose.msra.mxu0 0.0
    %1085 = vmatprep.subr.mxu0 0.0
    %1086 = vmatpush2.xpose.msra.mxu0 0.0
    %1087 = vmatprep.subr.mxu0 0.0
    %1088 = vmatpush2.xpose.msra.mxu0 0.0
    %1089 = vmatprep.subr.mxu0 0.0
    %1090 = vmatpush2.xpose.msra.mxu0 0.0
    %1091 = vmatprep.subr.mxu0 0.0
    %1092 = vmatpush2.xpose.msra.mxu0 0.0
    %1093 = vmatprep.subr.mxu0 0.0
    %1094 = vmatpush2.xpose.msra.mxu0 0.0
    %1095 = vmatprep.subr.mxu0 0.0
    %1096 = vmatpush2.xpose.msra.mxu0 0.0
    %1097 = vmatprep.subr.mxu0 0.0
    %1098 = vmatpush2.xpose.msra.mxu0 0.0
    %1099 = vmatprep.subr.mxu0 0.0
    %1100 = vmatpush2.xpose.msra.mxu0 0.0
    %1101 = vmatprep.subr.mxu0 0.0
    %1102 = vmatpush2.xpose.msra.mxu0 0.0
    %1103 = vmatprep.mubr.f32.mxu0 0.0
    %1104 = vmatmul.mubr.f32.gmra.mxu0 %v1034
    %v1105 = vpop.f32.mrf.mxu0
    %v1106 = vadd.f32 0.0, %v1105
    %v1107 = vpop.f32.mrf.mxu0
    %1108 = vdwg.mxu0
    %v1109 = vsel %vm195, %v729, 0
    %v1112 = vsel %vm195, %v185, 0
    %1114 = vmatprep.subr.mxu0 0.0
    %1115 = vmatpush1.xpose.msra.mxu0 0.0
    %1116 = vmatprep.subr.mxu0 0.0
    %1117 = vmatpush1.xpose.msra.mxu0 0.0
    %1118 = vmatprep.subr.mxu0 0.0
    %1119 = vmatpush1.xpose.msra.mxu0 0.0
    %1120 = vmatprep.subr.mxu0 0.0
    %1121 = vmatpush1.xpose.msra.mxu0 0.0
    %1122 = vmatprep.subr.mxu0 0.0
    %1123 = vmatpush1.xpose.msra.mxu0 0.0
    %1124 = vmatprep.subr.mxu0 0.0
    %1125 = vmatpush1.xpose.msra.mxu0 0.0
    %1126 = vmatprep.subr.mxu0 0.0
    %1127 = vmatpush1.xpose.msra.mxu0 0.0
    %1128 = vmatprep.subr.mxu0 0.0
    %1129 = vmatpush1.xpose.msra.mxu0 0.0
    %1130 = vmatprep.subr.mxu0 0.0
    %1131 = vmatpush1.xpose.msra.mxu0 0.0
    %1132 = vmatprep.subr.mxu0 0.0
    %1133 = vmatpush1.xpose.msra.mxu0 0.0
    %1134 = vmatprep.subr.mxu0 0.0
    %1135 = vmatpush1.xpose.msra.mxu0 0.0
    %1136 = vmatprep.subr.mxu0 0.0
    %1137 = vmatpush1.xpose.msra.mxu0 0.0
    %1138 = vmatprep.subr.mxu0 0.0
    %1139 = vmatpush1.xpose.msra.mxu0 0.0
    %1140 = vmatprep.subr.mxu0 0.0
    %1141 = vmatpush1.xpose.msra.mxu0 0.0
    %1142 = vmatprep.subr.mxu0 0.0
    %1143 = vmatpush1.xpose.msra.mxu0 0.0
    %1144 = vmatprep.subr.mxu0 0.0
    %1145 = vmatpush1.xpose.msra.mxu0 %v1112
    %1146 = vmatprep.subr.mxu0 0.0
    %1147 = vmatpush2.xpose.msra.mxu0 0.0
    %1148 = vmatprep.subr.mxu0 0.0
    %1149 = vmatpush2.xpose.msra.mxu0 0.0
    %1150 = vmatprep.subr.mxu0 0.0
    %1151 = vmatpush2.xpose.msra.mxu0 0.0
    %1152 = vmatprep.subr.mxu0 0.0
    %1153 = vmatpush2.xpose.msra.mxu0 0.0
    %1154 = vmatprep.subr.mxu0 0.0
    %1155 = vmatpush2.xpose.msra.mxu0 0.0
    %1156 = vmatprep.subr.mxu0 0.0
    %1157 = vmatpush2.xpose.msra.mxu0 0.0
    %1158 = vmatprep.subr.mxu0 0.0
    %1159 = vmatpush2.xpose.msra.mxu0 0.0
    %1160 = vmatprep.subr.mxu0 0.0
    %1161 = vmatpush2.xpose.msra.mxu0 0.0
    %1162 = vmatprep.subr.mxu0 0.0
    %1163 = vmatpush2.xpose.msra.mxu0 0.0
    %1164 = vmatprep.subr.mxu0 0.0
    %1165 = vmatpush2.xpose.msra.mxu0 0.0
    %1166 = vmatprep.subr.mxu0 0.0
    %1167 = vmatpush2.xpose.msra.mxu0 0.0
    %1168 = vmatprep.subr.mxu0 0.0
    %1169 = vmatpush2.xpose.msra.mxu0 0.0
    %1170 = vmatprep.subr.mxu0 0.0
    %1171 = vmatpush2.xpose.msra.mxu0 0.0
    %1172 = vmatprep.subr.mxu0 0.0
    %1173 = vmatpush2.xpose.msra.mxu0 0.0
    %1174 = vmatprep.subr.mxu0 0.0
    %1175 = vmatpush2.xpose.msra.mxu0 0.0
    %1176 = vmatprep.subr.mxu0 0.0
    %1177 = vmatpush2.xpose.msra.mxu0 0.0
    %1178 = vmatprep.mubr.f32.mxu0 0.0
    %1179 = vmatmul.mubr.f32.gmra.mxu0 %v1109
    %v1180 = vpop.f32.mrf.mxu0
    %v1181 = vadd.f32 0.0, %v1180
    %v1182 = vpop.f32.mrf.mxu0
    %1183 = vdwg.mxu0
    %v1184 = vsel %vm195, %v731, 0
    %v1187 = vsel %vm195, %v186, 0
    %1189 = vmatprep.subr.mxu0 0.0
    %1190 = vmatpush1.xpose.msra.mxu0 0.0
    %1191 = vmatprep.subr.mxu0 0.0
    %1192 = vmatpush1.xpose.msra.mxu0 0.0
    %1193 = vmatprep.subr.mxu0 0.0
    %1194 = vmatpush1.xpose.msra.mxu0 0.0
    %1195 = vmatprep.subr.mxu0 0.0
    %1196 = vmatpush1.xpose.msra.mxu0 0.0
    %1197 = vmatprep.subr.mxu0 0.0
    %1198 = vmatpush1.xpose.msra.mxu0 0.0
    %1199 = vmatprep.subr.mxu0 0.0
    %1200 = vmatpush1.xpose.msra.mxu0 0.0
    %1201 = vmatprep.subr.mxu0 0.0
    %1202 = vmatpush1.xpose.msra.mxu0 0.0
    %1203 = vmatprep.subr.mxu0 0.0
    %1204 = vmatpush1.xpose.msra.mxu0 0.0
    %1205 = vmatprep.subr.mxu0 0.0
    %1206 = vmatpush1.xpose.msra.mxu0 0.0
    %1207 = vmatprep.subr.mxu0 0.0
    %1208 = vmatpush1.xpose.msra.mxu0 0.0
    %1209 = vmatprep.subr.mxu0 0.0
    %1210 = vmatpush1.xpose.msra.mxu0 0.0
    %1211 = vmatprep.subr.mxu0 0.0
    %1212 = vmatpush1.xpose.msra.mxu0 0.0
    %1213 = vmatprep.subr.mxu0 0.0
    %1214 = vmatpush1.xpose.msra.mxu0 0.0
    %1215 = vmatprep.subr.mxu0 0.0
    %1216 = vmatpush1.xpose.msra.mxu0 0.0
    %1217 = vmatprep.subr.mxu0 0.0
    %1218 = vmatpush1.xpose.msra.mxu0 0.0
    %1219 = vmatprep.subr.mxu0 0.0
    %1220 = vmatpush1.xpose.msra.mxu0 %v1187
    %1221 = vmatprep.subr.mxu0 0.0
    %1222 = vmatpush2.xpose.msra.mxu0 0.0
    %1223 = vmatprep.subr.mxu0 0.0
    %1224 = vmatpush2.xpose.msra.mxu0 0.0
    %1225 = vmatprep.subr.mxu0 0.0
    %1226 = vmatpush2.xpose.msra.mxu0 0.0
    %1227 = vmatprep.subr.mxu0 0.0
    %1228 = vmatpush2.xpose.msra.mxu0 0.0
    %1229 = vmatprep.subr.mxu0 0.0
    %1230 = vmatpush2.xpose.msra.mxu0 0.0
    %1231 = vmatprep.subr.mxu0 0.0
    %1232 = vmatpush2.xpose.msra.mxu0 0.0
    %1233 = vmatprep.subr.mxu0 0.0
    %1234 = vmatpush2.xpose.msra.mxu0 0.0
    %1235 = vmatprep.subr.mxu0 0.0
    %1236 = vmatpush2.xpose.msra.mxu0 0.0
    %1237 = vmatprep.subr.mxu0 0.0
    %1238 = vmatpush2.xpose.msra.mxu0 0.0
    %1239 = vmatprep.subr.mxu0 0.0
    %1240 = vmatpush2.xpose.msra.mxu0 0.0
    %1241 = vmatprep.subr.mxu0 0.0
    %1242 = vmatpush2.xpose.msra.mxu0 0.0
    %1243 = vmatprep.subr.mxu0 0.0
    %1244 = vmatpush2.xpose.msra.mxu0 0.0
    %1245 = vmatprep.subr.mxu0 0.0
    %1246 = vmatpush2.xpose.msra.mxu0 0.0
    %1247 = vmatprep.subr.mxu0 0.0
    %1248 = vmatpush2.xpose.msra.mxu0 0.0
    %1249 = vmatprep.subr.mxu0 0.0
    %1250 = vmatpush2.xpose.msra.mxu0 0.0
    %1251 = vmatprep.subr.mxu0 0.0
    %1252 = vmatpush2.xpose.msra.mxu0 0.0
    %1253 = vmatprep.mubr.f32.mxu0 0.0
    %1254 = vmatmul.mubr.f32.gmra.mxu0 %v1184
    %v1255 = vpop.f32.mrf.mxu0
    %v1256 = vadd.f32 0.0, %v1255
    %v1257 = vpop.f32.mrf.mxu0
    %1258 = vdwg.mxu0
    %v1259 = vsel %vm195, %v733, 0
    %v1262 = vsel %vm195, %v187, 0
    %1264 = vmatprep.subr.mxu0 0.0
    %1265 = vmatpush1.xpose.msra.mxu0 0.0
    %1266 = vmatprep.subr.mxu0 0.0
    %1267 = vmatpush1.xpose.msra.mxu0 0.0
    %1268 = vmatprep.subr.mxu0 0.0
    %1269 = vmatpush1.xpose.msra.mxu0 0.0
    %1270 = vmatprep.subr.mxu0 0.0
    %1271 = vmatpush1.xpose.msra.mxu0 0.0
    %1272 = vmatprep.subr.mxu0 0.0
    %1273 = vmatpush1.xpose.msra.mxu0 0.0
    %1274 = vmatprep.subr.mxu0 0.0
    %1275 = vmatpush1.xpose.msra.mxu0 0.0
    %1276 = vmatprep.subr.mxu0 0.0
    %1277 = vmatpush1.xpose.msra.mxu0 0.0
    %1278 = vmatprep.subr.mxu0 0.0
    %1279 = vmatpush1.xpose.msra.mxu0 0.0
    %1280 = vmatprep.subr.mxu0 0.0
    %1281 = vmatpush1.xpose.msra.mxu0 0.0
    %1282 = vmatprep.subr.mxu0 0.0
    %1283 = vmatpush1.xpose.msra.mxu0 0.0
    %1284 = vmatprep.subr.mxu0 0.0
    %1285 = vmatpush1.xpose.msra.mxu0 0.0
    %1286 = vmatprep.subr.mxu0 0.0
    %1287 = vmatpush1.xpose.msra.mxu0 0.0
    %1288 = vmatprep.subr.mxu0 0.0
    %1289 = vmatpush1.xpose.msra.mxu0 0.0
    %1290 = vmatprep.subr.mxu0 0.0
    %1291 = vmatpush1.xpose.msra.mxu0 0.0
    %1292 = vmatprep.subr.mxu0 0.0
    %1293 = vmatpush1.xpose.msra.mxu0 0.0
    %1294 = vmatprep.subr.mxu0 0.0
    %1295 = vmatpush1.xpose.msra.mxu0 %v1262
    %1296 = vmatprep.subr.mxu0 0.0
    %1297 = vmatpush2.xpose.msra.mxu0 0.0
    %1298 = vmatprep.subr.mxu0 0.0
    %1299 = vmatpush2.xpose.msra.mxu0 0.0
    %1300 = vmatprep.subr.mxu0 0.0
    %1301 = vmatpush2.xpose.msra.mxu0 0.0
    %1302 = vmatprep.subr.mxu0 0.0
    %1303 = vmatpush2.xpose.msra.mxu0 0.0
    %1304 = vmatprep.subr.mxu0 0.0
    %1305 = vmatpush2.xpose.msra.mxu0 0.0
    %1306 = vmatprep.subr.mxu0 0.0
    %1307 = vmatpush2.xpose.msra.mxu0 0.0
    %1308 = vmatprep.subr.mxu0 0.0
    %1309 = vmatpush2.xpose.msra.mxu0 0.0
    %1310 = vmatprep.subr.mxu0 0.0
    %1311 = vmatpush2.xpose.msra.mxu0 0.0
    %1312 = vmatprep.subr.mxu0 0.0
    %1313 = vmatpush2.xpose.msra.mxu0 0.0
    %1314 = vmatprep.subr.mxu0 0.0
    %1315 = vmatpush2.xpose.msra.mxu0 0.0
    %1316 = vmatprep.subr.mxu0 0.0
    %1317 = vmatpush2.xpose.msra.mxu0 0.0
    %1318 = vmatprep.subr.mxu0 0.0
    %1319 = vmatpush2.xpose.msra.mxu0 0.0
    %1320 = vmatprep.subr.mxu0 0.0
    %1321 = vmatpush2.xpose.msra.mxu0 0.0
    %1322 = vmatprep.subr.mxu0 0.0
    %1323 = vmatpush2.xpose.msra.mxu0 0.0
    %1324 = vmatprep.subr.mxu0 0.0
    %1325 = vmatpush2.xpose.msra.mxu0 0.0
    %1326 = vmatprep.subr.mxu0 0.0
    %1327 = vmatpush2.xpose.msra.mxu0 0.0
    %1328 = vmatprep.mubr.f32.mxu0 0.0
    %1329 = vmatmul.mubr.f32.gmra.mxu0 %v1259
    %v1330 = vpop.f32.mrf.mxu0
    %v1331 = vadd.f32 0.0, %v1330
    %v1332 = vpop.f32.mrf.mxu0
    %1333 = vdwg.mxu0
    %vm1334 = vcmask 57344
    %v1335 = vsel %vm1334, %v806, -inf
    %1336 = vmax.xlane.f32.xlu0 %v1335
    %v1337 = vpop.xlane.xlu0 %1336
    %v1338 = vsel %vm1334, %v881, -inf
    %1339 = vmax.xlane.f32.xlu0 %v1338
    %v1340 = vpop.xlane.xlu0 %1339
    %v1341 = vsel %vm1334, %v956, -inf
    %1342 = vmax.xlane.f32.xlu0 %v1341
    %v1343 = vpop.xlane.xlu0 %1342
    %v1344 = vsel %vm1334, %v1031, -inf
    %1345 = vmax.xlane.f32.xlu0 %v1344
    %v1346 = vpop.xlane.xlu0 %1345
    %v1347 = vsel %vm1334, %v1106, -inf
    %1348 = vmax.xlane.f32.xlu0 %v1347
    %v1349 = vpop.xlane.xlu0 %1348
    %v1350 = vsel %vm1334, %v1181, -inf
    %1351 = vmax.xlane.f32.xlu0 %v1350
    %v1352 = vpop.xlane.xlu0 %1351
    %v1353 = vsel %vm1334, %v1256, -inf
    %1354 = vmax.xlane.f32.xlu0 %v1353
    %v1355 = vpop.xlane.xlu0 %1354
    %v1356 = vsel %vm1334, %v1331, -inf
    %1357 = vmax.xlane.f32.xlu0 %v1356
    %v1358 = vpop.xlane.xlu0 %1357
    %v1359 = vsub.f32 %v806, %v1337
    %v1360 = vsub.f32 %v881, %v1340
    %v1361 = vsub.f32 %v956, %v1343
    %v1362 = vsub.f32 %v1031, %v1346
    %v1363 = vsub.f32 %v1106, %v1349
    %v1364 = vsub.f32 %v1181, %v1352
    %v1365 = vsub.f32 %v1256, %v1355
    %v1366 = vsub.f32 %v1331, %v1358
    %v1367 = vmul.f32 %v1359, 1.442695
    %v1368 = vpow.pop %v1367
    %v1369 = vmul.f32 %v1360, 1.442695
    %v1370 = vpow.pop %v1369
    %v1371 = vmul.f32 %v1361, 1.442695
    %v1372 = vpow.pop %v1371
    %v1373 = vmul.f32 %v1362, 1.442695
    %v1374 = vpow.pop %v1373
    %v1375 = vmul.f32 %v1363, 1.442695
    %v1376 = vpow.pop %v1375
    %v1377 = vmul.f32 %v1364, 1.442695
    %v1378 = vpow.pop %v1377
    %v1379 = vmul.f32 %v1365, 1.442695
    %v1380 = vpow.pop %v1379
    %v1381 = vmul.f32 %v1366, 1.442695
    %v1382 = vpow.pop %v1381
    %v1383 = vsel %vm1334, %v1368, 0.0
    %1384 = vadd.xlane.f32.xlu0 %v1383
    %v1385 = vpop.xlane.xlu0 %1384
    %v1386 = vsel %vm1334, %v1370, 0.0
    %1387 = vadd.xlane.f32.xlu0 %v1386
    %v1388 = vpop.xlane.xlu0 %1387
    %v1389 = vsel %vm1334, %v1372, 0.0
    %1390 = vadd.xlane.f32.xlu0 %v1389
    %v1391 = vpop.xlane.xlu0 %1390
    %v1392 = vsel %vm1334, %v1374, 0.0
    %1393 = vadd.xlane.f32.xlu0 %v1392
    %v1394 = vpop.xlane.xlu0 %1393
    %v1395 = vsel %vm1334, %v1376, 0.0
    %1396 = vadd.xlane.f32.xlu0 %v1395
    %v1397 = vpop.xlane.xlu0 %1396
    %v1398 = vsel %vm1334, %v1378, 0.0
    %1399 = vadd.xlane.f32.xlu0 %v1398
    %v1400 = vpop.xlane.xlu0 %1399
    %v1401 = vsel %vm1334, %v1380, 0.0
    %1402 = vadd.xlane.f32.xlu0 %v1401
    %v1403 = vpop.xlane.xlu0 %1402
    %v1404 = vsel %vm1334, %v1382, 0.0
    %1405 = vadd.xlane.f32.xlu0 %v1404
    %v1406 = vpop.xlane.xlu0 %1405
    %v1407 = vrcp.pop %v1385
    %v1408 = vmul.f32 %v1368, %v1407
    %v1409 = vrcp.pop %v1388
    %v1410 = vmul.f32 %v1370, %v1409
    %v1411 = vrcp.pop %v1391
    %v1412 = vmul.f32 %v1372, %v1411
    %v1413 = vrcp.pop %v1394
    %v1414 = vmul.f32 %v1374, %v1413
    %v1415 = vrcp.pop %v1397
    %v1416 = vmul.f32 %v1376, %v1415
    %v1417 = vrcp.pop %v1400
    %v1418 = vmul.f32 %v1378, %v1417
    %v1419 = vrcp.pop %v1403
    %v1420 = vmul.f32 %v1380, %v1419
    %v1421 = vrcp.pop %v1406
    %v1422 = vmul.f32 %v1382, %v1421
    %vm1423 = vcmask 64512
    %v1425 = vsel %vm1423, %v1408, 0
    %1427 = vmatprep.subr.mxu0 0.0
    %1428 = vmatpush1.msra.mxu0 0.0
    %1429 = vmatprep.subr.mxu0 0.0
    %1430 = vmatpush1.msra.mxu0 0.0
    %1431 = vmatprep.subr.mxu0 0.0
    %1432 = vmatpush1.msra.mxu0 0.0
    %1433 = vmatprep.subr.mxu0 0.0
    %1434 = vmatpush1.msra.mxu0 0.0
    %1435 = vmatprep.subr.mxu0 0.0
    %1436 = vmatpush1.msra.mxu0 0.0
    %1437 = vmatprep.subr.mxu0 0.0
    %1438 = vmatpush1.msra.mxu0 0.0
    %1439 = vmatprep.subr.mxu0 0.0
    %1440 = vmatpush1.msra.mxu0 0.0
    %1441 = vmatprep.subr.mxu0 0.0
    %1442 = vmatpush1.msra.mxu0 0.0
    %1443 = vmatprep.subr.mxu0 0.0
    %1444 = vmatpush1.msra.mxu0 0.0
    %1445 = vmatprep.subr.mxu0 0.0
    %1446 = vmatpush1.msra.mxu0 0.0
    %1447 = vmatprep.subr.mxu0 0.0
    %1448 = vmatpush1.msra.mxu0 0.0
    %1449 = vmatprep.subr.mxu0 0.0
    %1450 = vmatpush1.msra.mxu0 0.0
    %1451 = vmatprep.subr.mxu0 0.0
    %1452 = vmatpush1.msra.mxu0 0.0
    %1453 = vmatprep.subr.mxu0 0.0
    %1454 = vmatpush1.msra.mxu0 0.0
    %1455 = vmatprep.subr.mxu0 0.0
    %1456 = vmatpush1.msra.mxu0 0.0
    %1457 = vmatprep.subr.mxu0 0.0
    %1458 = vmatpush1.msra.mxu0 %v180
    %1459 = vmatprep.subr.mxu0 0.0
    %1460 = vmatpush2.msra.mxu0 0.0
    %1461 = vmatprep.subr.mxu0 0.0
    %1462 = vmatpush2.msra.mxu0 0.0
    %1463 = vmatprep.subr.mxu0 0.0
    %1464 = vmatpush2.msra.mxu0 0.0
    %1465 = vmatprep.subr.mxu0 0.0
    %1466 = vmatpush2.msra.mxu0 0.0
    %1467 = vmatprep.subr.mxu0 0.0
    %1468 = vmatpush2.msra.mxu0 0.0
    %1469 = vmatprep.subr.mxu0 0.0
    %1470 = vmatpush2.msra.mxu0 0.0
    %1471 = vmatprep.subr.mxu0 0.0
    %1472 = vmatpush2.msra.mxu0 0.0
    %1473 = vmatprep.subr.mxu0 0.0
    %1474 = vmatpush2.msra.mxu0 0.0
    %1475 = vmatprep.subr.mxu0 0.0
    %1476 = vmatpush2.msra.mxu0 0.0
    %1477 = vmatprep.subr.mxu0 0.0
    %1478 = vmatpush2.msra.mxu0 0.0
    %1479 = vmatprep.subr.mxu0 0.0
    %1480 = vmatpush2.msra.mxu0 0.0
    %1481 = vmatprep.subr.mxu0 0.0
    %1482 = vmatpush2.msra.mxu0 0.0
    %1483 = vmatprep.subr.mxu0 0.0
    %1484 = vmatpush2.msra.mxu0 0.0
    %1485 = vmatprep.subr.mxu0 0.0
    %1486 = vmatpush2.msra.mxu0 0.0
    %1487 = vmatprep.subr.mxu0 0.0
    %1488 = vmatpush2.msra.mxu0 0.0
    %1489 = vmatprep.subr.mxu0 0.0
    %1490 = vmatpush2.msra.mxu0 0.0
    %1491 = vmatprep.mubr.f32.mxu0 0.0
    %1492 = vmatmul.mubr.f32.gmra.mxu0 %v1425
    %v1493 = vpop.f32.mrf.mxu0
    %v1494 = vadd.f32 0.0, %v1493
    %v1495 = vpop.f32.mrf.mxu0
    %1496 = vdwg.mxu0
    %v1498 = vsel %vm1423, %v1410, 0
    %1500 = vmatprep.subr.mxu0 0.0
    %1501 = vmatpush1.msra.mxu0 0.0
    %1502 = vmatprep.subr.mxu0 0.0
    %1503 = vmatpush1.msra.mxu0 0.0
    %1504 = vmatprep.subr.mxu0 0.0
    %1505 = vmatpush1.msra.mxu0 0.0
    %1506 = vmatprep.subr.mxu0 0.0
    %1507 = vmatpush1.msra.mxu0 0.0
    %1508 = vmatprep.subr.mxu0 0.0
    %1509 = vmatpush1.msra.mxu0 0.0
    %1510 = vmatprep.subr.mxu0 0.0
    %1511 = vmatpush1.msra.mxu0 0.0
    %1512 = vmatprep.subr.mxu0 0.0
    %1513 = vmatpush1.msra.mxu0 0.0
    %1514 = vmatprep.subr.mxu0 0.0
    %1515 = vmatpush1.msra.mxu0 0.0
    %1516 = vmatprep.subr.mxu0 0.0
    %1517 = vmatpush1.msra.mxu0 0.0
    %1518 = vmatprep.subr.mxu0 0.0
    %1519 = vmatpush1.msra.mxu0 0.0
    %1520 = vmatprep.subr.mxu0 0.0
    %1521 = vmatpush1.msra.mxu0 0.0
    %1522 = vmatprep.subr.mxu0 0.0
    %1523 = vmatpush1.msra.mxu0 0.0
    %1524 = vmatprep.subr.mxu0 0.0
    %1525 = vmatpush1.msra.mxu0 0.0
    %1526 = vmatprep.subr.mxu0 0.0
    %1527 = vmatpush1.msra.mxu0 0.0
    %1528 = vmatprep.subr.mxu0 0.0
    %1529 = vmatpush1.msra.mxu0 0.0
    %1530 = vmatprep.subr.mxu0 0.0
    %1531 = vmatpush1.msra.mxu0 %v181
    %1532 = vmatprep.subr.mxu0 0.0
    %1533 = vmatpush2.msra.mxu0 0.0
    %1534 = vmatprep.subr.mxu0 0.0
    %1535 = vmatpush2.msra.mxu0 0.0
    %1536 = vmatprep.subr.mxu0 0.0
    %1537 = vmatpush2.msra.mxu0 0.0
    %1538 = vmatprep.subr.mxu0 0.0
    %1539 = vmatpush2.msra.mxu0 0.0
    %1540 = vmatprep.subr.mxu0 0.0
    %1541 = vmatpush2.msra.mxu0 0.0
    %1542 = vmatprep.subr.mxu0 0.0
    %1543 = vmatpush2.msra.mxu0 0.0
    %1544 = vmatprep.subr.mxu0 0.0
    %1545 = vmatpush2.msra.mxu0 0.0
    %1546 = vmatprep.subr.mxu0 0.0
    %1547 = vmatpush2.msra.mxu0 0.0
    %1548 = vmatprep.subr.mxu0 0.0
    %1549 = vmatpush2.msra.mxu0 0.0
    %1550 = vmatprep.subr.mxu0 0.0
    %1551 = vmatpush2.msra.mxu0 0.0
    %1552 = vmatprep.subr.mxu0 0.0
    %1553 = vmatpush2.msra.mxu0 0.0
    %1554 = vmatprep.subr.mxu0 0.0
    %1555 = vmatpush2.msra.mxu0 0.0
    %1556 = vmatprep.subr.mxu0 0.0
    %1557 = vmatpush2.msra.mxu0 0.0
    %1558 = vmatprep.subr.mxu0 0.0
    %1559 = vmatpush2.msra.mxu0 0.0
    %1560 = vmatprep.subr.mxu0 0.0
    %1561 = vmatpush2.msra.mxu0 0.0
    %1562 = vmatprep.subr.mxu0 0.0
    %1563 = vmatpush2.msra.mxu0 0.0
    %1564 = vmatprep.mubr.f32.mxu0 0.0
    %1565 = vmatmul.mubr.f32.gmra.mxu0 %v1498
    %v1566 = vpop.f32.mrf.mxu0
    %v1567 = vadd.f32 0.0, %v1566
    %v1568 = vpop.f32.mrf.mxu0
    %1569 = vdwg.mxu0
    %v1571 = vsel %vm1423, %v1412, 0
    %1573 = vmatprep.subr.mxu0 0.0
    %1574 = vmatpush1.msra.mxu0 0.0
    %1575 = vmatprep.subr.mxu0 0.0
    %1576 = vmatpush1.msra.mxu0 0.0
    %1577 = vmatprep.subr.mxu0 0.0
    %1578 = vmatpush1.msra.mxu0 0.0
    %1579 = vmatprep.subr.mxu0 0.0
    %1580 = vmatpush1.msra.mxu0 0.0
    %1581 = vmatprep.subr.mxu0 0.0
    %1582 = vmatpush1.msra.mxu0 0.0
    %1583 = vmatprep.subr.mxu0 0.0
    %1584 = vmatpush1.msra.mxu0 0.0
    %1585 = vmatprep.subr.mxu0 0.0
    %1586 = vmatpush1.msra.mxu0 0.0
    %1587 = vmatprep.subr.mxu0 0.0
    %1588 = vmatpush1.msra.mxu0 0.0
    %1589 = vmatprep.subr.mxu0 0.0
    %1590 = vmatpush1.msra.mxu0 0.0
    %1591 = vmatprep.subr.mxu0 0.0
    %1592 = vmatpush1.msra.mxu0 0.0
    %1593 = vmatprep.subr.mxu0 0.0
    %1594 = vmatpush1.msra.mxu0 0.0
    %1595 = vmatprep.subr.mxu0 0.0
    %1596 = vmatpush1.msra.mxu0 0.0
    %1597 = vmatprep.subr.mxu0 0.0
    %1598 = vmatpush1.msra.mxu0 0.0
    %1599 = vmatprep.subr.mxu0 0.0
    %1600 = vmatpush1.msra.mxu0 0.0
    %1601 = vmatprep.subr.mxu0 0.0
    %1602 = vmatpush1.msra.mxu0 0.0
    %1603 = vmatprep.subr.mxu0 0.0
    %1604 = vmatpush1.msra.mxu0 %v182
    %1605 = vmatprep.subr.mxu0 0.0
    %1606 = vmatpush2.msra.mxu0 0.0
    %1607 = vmatprep.subr.mxu0 0.0
    %1608 = vmatpush2.msra.mxu0 0.0
    %1609 = vmatprep.subr.mxu0 0.0
    %1610 = vmatpush2.msra.mxu0 0.0
    %1611 = vmatprep.subr.mxu0 0.0
    %1612 = vmatpush2.msra.mxu0 0.0
    %1613 = vmatprep.subr.mxu0 0.0
    %1614 = vmatpush2.msra.mxu0 0.0
    %1615 = vmatprep.subr.mxu0 0.0
    %1616 = vmatpush2.msra.mxu0 0.0
    %1617 = vmatprep.subr.mxu0 0.0
    %1618 = vmatpush2.msra.mxu0 0.0
    %1619 = vmatprep.subr.mxu0 0.0
    %1620 = vmatpush2.msra.mxu0 0.0
    %1621 = vmatprep.subr.mxu0 0.0
    %1622 = vmatpush2.msra.mxu0 0.0
    %1623 = vmatprep.subr.mxu0 0.0
    %1624 = vmatpush2.msra.mxu0 0.0
    %1625 = vmatprep.subr.mxu0 0.0
    %1626 = vmatpush2.msra.mxu0 0.0
    %1627 = vmatprep.subr.mxu0 0.0
    %1628 = vmatpush2.msra.mxu0 0.0
    %1629 = vmatprep.subr.mxu0 0.0
    %1630 = vmatpush2.msra.mxu0 0.0
    %1631 = vmatprep.subr.mxu0 0.0
    %1632 = vmatpush2.msra.mxu0 0.0
    %1633 = vmatprep.subr.mxu0 0.0
    %1634 = vmatpush2.msra.mxu0 0.0
    %1635 = vmatprep.subr.mxu0 0.0
    %1636 = vmatpush2.msra.mxu0 0.0
    %1637 = vmatprep.mubr.f32.mxu0 0.0
    %1638 = vmatmul.mubr.f32.gmra.mxu0 %v1571
    %v1639 = vpop.f32.mrf.mxu0
    %v1640 = vadd.f32 0.0, %v1639
    %v1641 = vpop.f32.mrf.mxu0
    %1642 = vdwg.mxu0
    %v1644 = vsel %vm1423, %v1414, 0
    %1646 = vmatprep.subr.mxu0 0.0
    %1647 = vmatpush1.msra.mxu0 0.0
    %1648 = vmatprep.subr.mxu0 0.0
    %1649 = vmatpush1.msra.mxu0 0.0
    %1650 = vmatprep.subr.mxu0 0.0
    %1651 = vmatpush1.msra.mxu0 0.0
    %1652 = vmatprep.subr.mxu0 0.0
    %1653 = vmatpush1.msra.mxu0 0.0
    %1654 = vmatprep.subr.mxu0 0.0
    %1655 = vmatpush1.msra.mxu0 0.0
    %1656 = vmatprep.subr.mxu0 0.0
    %1657 = vmatpush1.msra.mxu0 0.0
    %1658 = vmatprep.subr.mxu0 0.0
    %1659 = vmatpush1.msra.mxu0 0.0
    %1660 = vmatprep.subr.mxu0 0.0
    %1661 = vmatpush1.msra.mxu0 0.0
    %1662 = vmatprep.subr.mxu0 0.0
    %1663 = vmatpush1.msra.mxu0 0.0
    %1664 = vmatprep.subr.mxu0 0.0
    %1665 = vmatpush1.msra.mxu0 0.0
    %1666 = vmatprep.subr.mxu0 0.0
    %1667 = vmatpush1.msra.mxu0 0.0
    %1668 = vmatprep.subr.mxu0 0.0
    %1669 = vmatpush1.msra.mxu0 0.0
    %1670 = vmatprep.subr.mxu0 0.0
    %1671 = vmatpush1.msra.mxu0 0.0
    %1672 = vmatprep.subr.mxu0 0.0
    %1673 = vmatpush1.msra.mxu0 0.0
    %1674 = vmatprep.subr.mxu0 0.0
    %1675 = vmatpush1.msra.mxu0 0.0
    %1676 = vmatprep.subr.mxu0 0.0
    %1677 = vmatpush1.msra.mxu0 %v183
    %1678 = vmatprep.subr.mxu0 0.0
    %1679 = vmatpush2.msra.mxu0 0.0
    %1680 = vmatprep.subr.mxu0 0.0
    %1681 = vmatpush2.msra.mxu0 0.0
    %1682 = vmatprep.subr.mxu0 0.0
    %1683 = vmatpush2.msra.mxu0 0.0
    %1684 = vmatprep.subr.mxu0 0.0
    %1685 = vmatpush2.msra.mxu0 0.0
    %1686 = vmatprep.subr.mxu0 0.0
    %1687 = vmatpush2.msra.mxu0 0.0
    %1688 = vmatprep.subr.mxu0 0.0
    %1689 = vmatpush2.msra.mxu0 0.0
    %1690 = vmatprep.subr.mxu0 0.0
    %1691 = vmatpush2.msra.mxu0 0.0
    %1692 = vmatprep.subr.mxu0 0.0
    %1693 = vmatpush2.msra.mxu0 0.0
    %1694 = vmatprep.subr.mxu0 0.0
    %1695 = vmatpush2.msra.mxu0 0.0
    %1696 = vmatprep.subr.mxu0 0.0
    %1697 = vmatpush2.msra.mxu0 0.0
    %1698 = vmatprep.subr.mxu0 0.0
    %1699 = vmatpush2.msra.mxu0 0.0
    %1700 = vmatprep.subr.mxu0 0.0
    %1701 = vmatpush2.msra.mxu0 0.0
    %1702 = vmatprep.subr.mxu0 0.0
    %1703 = vmatpush2.msra.mxu0 0.0
    %1704 = vmatprep.subr.mxu0 0.0
    %1705 = vmatpush2.msra.mxu0 0.0
    %1706 = vmatprep.subr.mxu0 0.0
    %1707 = vmatpush2.msra.mxu0 0.0
    %1708 = vmatprep.subr.mxu0 0.0
    %1709 = vmatpush2.msra.mxu0 0.0
    %1710 = vmatprep.mubr.f32.mxu0 0.0
    %1711 = vmatmul.mubr.f32.gmra.mxu0 %v1644
    %v1712 = vpop.f32.mrf.mxu0
    %v1713 = vadd.f32 0.0, %v1712
    %v1714 = vpop.f32.mrf.mxu0
    %1715 = vdwg.mxu0
    %v1717 = vsel %vm1423, %v1416, 0
    %1719 = vmatprep.subr.mxu0 0.0
    %1720 = vmatpush1.msra.mxu0 0.0
    %1721 = vmatprep.subr.mxu0 0.0
    %1722 = vmatpush1.msra.mxu0 0.0
    %1723 = vmatprep.subr.mxu0 0.0
    %1724 = vmatpush1.msra.mxu0 0.0
    %1725 = vmatprep.subr.mxu0 0.0
    %1726 = vmatpush1.msra.mxu0 0.0
    %1727 = vmatprep.subr.mxu0 0.0
    %1728 = vmatpush1.msra.mxu0 0.0
    %1729 = vmatprep.subr.mxu0 0.0
    %1730 = vmatpush1.msra.mxu0 0.0
    %1731 = vmatprep.subr.mxu0 0.0
    %1732 = vmatpush1.msra.mxu0 0.0
    %1733 = vmatprep.subr.mxu0 0.0
    %1734 = vmatpush1.msra.mxu0 0.0
    %1735 = vmatprep.subr.mxu0 0.0
    %1736 = vmatpush1.msra.mxu0 0.0
    %1737 = vmatprep.subr.mxu0 0.0
    %1738 = vmatpush1.msra.mxu0 0.0
    %1739 = vmatprep.subr.mxu0 0.0
    %1740 = vmatpush1.msra.mxu0 0.0
    %1741 = vmatprep.subr.mxu0 0.0
    %1742 = vmatpush1.msra.mxu0 0.0
    %1743 = vmatprep.subr.mxu0 0.0
    %1744 = vmatpush1.msra.mxu0 0.0
    %1745 = vmatprep.subr.mxu0 0.0
    %1746 = vmatpush1.msra.mxu0 0.0
    %1747 = vmatprep.subr.mxu0 0.0
    %1748 = vmatpush1.msra.mxu0 0.0
    %1749 = vmatprep.subr.mxu0 0.0
    %1750 = vmatpush1.msra.mxu0 %v184
    %1751 = vmatprep.subr.mxu0 0.0
    %1752 = vmatpush2.msra.mxu0 0.0
    %1753 = vmatprep.subr.mxu0 0.0
    %1754 = vmatpush2.msra.mxu0 0.0
    %1755 = vmatprep.subr.mxu0 0.0
    %1756 = vmatpush2.msra.mxu0 0.0
    %1757 = vmatprep.subr.mxu0 0.0
    %1758 = vmatpush2.msra.mxu0 0.0
    %1759 = vmatprep.subr.mxu0 0.0
    %1760 = vmatpush2.msra.mxu0 0.0
    %1761 = vmatprep.subr.mxu0 0.0
    %1762 = vmatpush2.msra.mxu0 0.0
    %1763 = vmatprep.subr.mxu0 0.0
    %1764 = vmatpush2.msra.mxu0 0.0
    %1765 = vmatprep.subr.mxu0 0.0
    %1766 = vmatpush2.msra.mxu0 0.0
    %1767 = vmatprep.subr.mxu0 0.0
    %1768 = vmatpush2.msra.mxu0 0.0
    %1769 = vmatprep.subr.mxu0 0.0
    %1770 = vmatpush2.msra.mxu0 0.0
    %1771 = vmatprep.subr.mxu0 0.0
    %1772 = vmatpush2.msra.mxu0 0.0
    %1773 = vmatprep.subr.mxu0 0.0
    %1774 = vmatpush2.msra.mxu0 0.0
    %1775 = vmatprep.subr.mxu0 0.0
    %1776 = vmatpush2.msra.mxu0 0.0
    %1777 = vmatprep.subr.mxu0 0.0
    %1778 = vmatpush2.msra.mxu0 0.0
    %1779 = vmatprep.subr.mxu0 0.0
    %1780 = vmatpush2.msra.mxu0 0.0
    %1781 = vmatprep.subr.mxu0 0.0
    %1782 = vmatpush2.msra.mxu0 0.0
    %1783 = vmatprep.mubr.f32.mxu0 0.0
    %1784 = vmatmul.mubr.f32.gmra.mxu0 %v1717
    %v1785 = vpop.f32.mrf.mxu0
    %v1786 = vadd.f32 0.0, %v1785
    %v1787 = vpop.f32.mrf.mxu0
    %1788 = vdwg.mxu0
    %v1790 = vsel %vm1423, %v1418, 0
    %1792 = vmatprep.subr.mxu0 0.0
    %1793 = vmatpush1.msra.mxu0 0.0
    %1794 = vmatprep.subr.mxu0 0.0
    %1795 = vmatpush1.msra.mxu0 0.0
    %1796 = vmatprep.subr.mxu0 0.0
    %1797 = vmatpush1.msra.mxu0 0.0
    %1798 = vmatprep.subr.mxu0 0.0
    %1799 = vmatpush1.msra.mxu0 0.0
    %1800 = vmatprep.subr.mxu0 0.0
    %1801 = vmatpush1.msra.mxu0 0.0
    %1802 = vmatprep.subr.mxu0 0.0
    %1803 = vmatpush1.msra.mxu0 0.0
    %1804 = vmatprep.subr.mxu0 0.0
    %1805 = vmatpush1.msra.mxu0 0.0
    %1806 = vmatprep.subr.mxu0 0.0
    %1807 = vmatpush1.msra.mxu0 0.0
    %1808 = vmatprep.subr.mxu0 0.0
    %1809 = vmatpush1.msra.mxu0 0.0
    %1810 = vmatprep.subr.mxu0 0.0
    %1811 = vmatpush1.msra.mxu0 0.0
    %1812 = vmatprep.subr.mxu0 0.0
    %1813 = vmatpush1.msra.mxu0 0.0
    %1814 = vmatprep.subr.mxu0 0.0
    %1815 = vmatpush1.msra.mxu0 0.0
    %1816 = vmatprep.subr.mxu0 0.0
    %1817 = vmatpush1.msra.mxu0 0.0
    %1818 = vmatprep.subr.mxu0 0.0
    %1819 = vmatpush1.msra.mxu0 0.0
    %1820 = vmatprep.subr.mxu0 0.0
    %1821 = vmatpush1.msra.mxu0 0.0
    %1822 = vmatprep.subr.mxu0 0.0
    %1823 = vmatpush1.msra.mxu0 %v185
    %1824 = vmatprep.subr.mxu0 0.0
    %1825 = vmatpush2.msra.mxu0 0.0
    %1826 = vmatprep.subr.mxu0 0.0
    %1827 = vmatpush2.msra.mxu0 0.0
    %1828 = vmatprep.subr.mxu0 0.0
    %1829 = vmatpush2.msra.mxu0 0.0
    %1830 = vmatprep.subr.mxu0 0.0
    %1831 = vmatpush2.msra.mxu0 0.0
    %1832 = vmatprep.subr.mxu0 0.0
    %1833 = vmatpush2.msra.mxu0 0.0
    %1834 = vmatprep.subr.mxu0 0.0
    %1835 = vmatpush2.msra.mxu0 0.0
    %1836 = vmatprep.subr.mxu0 0.0
    %1837 = vmatpush2.msra.mxu0 0.0
    %1838 = vmatprep.subr.mxu0 0.0
    %1839 = vmatpush2.msra.mxu0 0.0
    %1840 = vmatprep.subr.mxu0 0.0
    %1841 = vmatpush2.msra.mxu0 0.0
    %1842 = vmatprep.subr.mxu0 0.0
    %1843 = vmatpush2.msra.mxu0 0.0
    %1844 = vmatprep.subr.mxu0 0.0
    %1845 = vmatpush2.msra.mxu0 0.0
    %1846 = vmatprep.subr.mxu0 0.0
    %1847 = vmatpush2.msra.mxu0 0.0
    %1848 = vmatprep.subr.mxu0 0.0
    %1849 = vmatpush2.msra.mxu0 0.0
    %1850 = vmatprep.subr.mxu0 0.0
    %1851 = vmatpush2.msra.mxu0 0.0
    %1852 = vmatprep.subr.mxu0 0.0
    %1853 = vmatpush2.msra.mxu0 0.0
    %1854 = vmatprep.subr.mxu0 0.0
    %1855 = vmatpush2.msra.mxu0 0.0
    %1856 = vmatprep.mubr.f32.mxu0 0.0
    %1857 = vmatmul.mubr.f32.gmra.mxu0 %v1790
    %v1858 = vpop.f32.mrf.mxu0
    %v1859 = vadd.f32 0.0, %v1858
    %v1860 = vpop.f32.mrf.mxu0
    %1861 = vdwg.mxu0
    %v1863 = vsel %vm1423, %v1420, 0
    %1865 = vmatprep.subr.mxu0 0.0
    %1866 = vmatpush1.msra.mxu0 0.0
    %1867 = vmatprep.subr.mxu0 0.0
    %1868 = vmatpush1.msra.mxu0 0.0
    %1869 = vmatprep.subr.mxu0 0.0
    %1870 = vmatpush1.msra.mxu0 0.0
    %1871 = vmatprep.subr.mxu0 0.0
    %1872 = vmatpush1.msra.mxu0 0.0
    %1873 = vmatprep.subr.mxu0 0.0
    %1874 = vmatpush1.msra.mxu0 0.0
    %1875 = vmatprep.subr.mxu0 0.0
    %1876 = vmatpush1.msra.mxu0 0.0
    %1877 = vmatprep.subr.mxu0 0.0
    %1878 = vmatpush1.msra.mxu0 0.0
    %1879 = vmatprep.subr.mxu0 0.0
    %1880 = vmatpush1.msra.mxu0 0.0
    %1881 = vmatprep.subr.mxu0 0.0
    %1882 = vmatpush1.msra.mxu0 0.0
    %1883 = vmatprep.subr.mxu0 0.0
    %1884 = vmatpush1.msra.mxu0 0.0
    %1885 = vmatprep.subr.mxu0 0.0
    %1886 = vmatpush1.msra.mxu0 0.0
    %1887 = vmatprep.subr.mxu0 0.0
    %1888 = vmatpush1.msra.mxu0 0.0
    %1889 = vmatprep.subr.mxu0 0.0
    %1890 = vmatpush1.msra.mxu0 0.0
    %1891 = vmatprep.subr.mxu0 0.0
    %1892 = vmatpush1.msra.mxu0 0.0
    %1893 = vmatprep.subr.mxu0 0.0
    %1894 = vmatpush1.msra.mxu0 0.0
    %1895 = vmatprep.subr.mxu0 0.0
    %1896 = vmatpush1.msra.mxu0 %v186
    %1897 = vmatprep.subr.mxu0 0.0
    %1898 = vmatpush2.msra.mxu0 0.0
    %1899 = vmatprep.subr.mxu0 0.0
    %1900 = vmatpush2.msra.mxu0 0.0
    %1901 = vmatprep.subr.mxu0 0.0
    %1902 = vmatpush2.msra.mxu0 0.0
    %1903 = vmatprep.subr.mxu0 0.0
    %1904 = vmatpush2.msra.mxu0 0.0
    %1905 = vmatprep.subr.mxu0 0.0
    %1906 = vmatpush2.msra.mxu0 0.0
    %1907 = vmatprep.subr.mxu0 0.0
    %1908 = vmatpush2.msra.mxu0 0.0
    %1909 = vmatprep.subr.mxu0 0.0
    %1910 = vmatpush2.msra.mxu0 0.0
    %1911 = vmatprep.subr.mxu0 0.0
    %1912 = vmatpush2.msra.mxu0 0.0
    %1913 = vmatprep.subr.mxu0 0.0
    %1914 = vmatpush2.msra.mxu0 0.0
    %1915 = vmatprep.subr.mxu0 0.0
    %1916 = vmatpush2.msra.mxu0 0.0
    %1917 = vmatprep.subr.mxu0 0.0
    %1918 = vmatpush2.msra.mxu0 0.0
    %1919 = vmatprep.subr.mxu0 0.0
    %1920 = vmatpush2.msra.mxu0 0.0
    %1921 = vmatprep.subr.mxu0 0.0
    %1922 = vmatpush2.msra.mxu0 0.0
    %1923 = vmatprep.subr.mxu0 0.0
    %1924 = vmatpush2.msra.mxu0 0.0
    %1925 = vmatprep.subr.mxu0 0.0
    %1926 = vmatpush2.msra.mxu0 0.0
    %1927 = vmatprep.subr.mxu0 0.0
    %1928 = vmatpush2.msra.mxu0 0.0
    %1929 = vmatprep.mubr.f32.mxu0 0.0
    %1930 = vmatmul.mubr.f32.gmra.mxu0 %v1863
    %v1931 = vpop.f32.mrf.mxu0
    %v1932 = vadd.f32 0.0, %v1931
    %v1933 = vpop.f32.mrf.mxu0
    %1934 = vdwg.mxu0
    %v1936 = vsel %vm1423, %v1422, 0
    %1938 = vmatprep.subr.mxu0 0.0
    %1939 = vmatpush1.msra.mxu0 0.0
    %1940 = vmatprep.subr.mxu0 0.0
    %1941 = vmatpush1.msra.mxu0 0.0
    %1942 = vmatprep.subr.mxu0 0.0
    %1943 = vmatpush1.msra.mxu0 0.0
    %1944 = vmatprep.subr.mxu0 0.0
    %1945 = vmatpush1.msra.mxu0 0.0
    %1946 = vmatprep.subr.mxu0 0.0
    %1947 = vmatpush1.msra.mxu0 0.0
    %1948 = vmatprep.subr.mxu0 0.0
    %1949 = vmatpush1.msra.mxu0 0.0
    %1950 = vmatprep.subr.mxu0 0.0
    %1951 = vmatpush1.msra.mxu0 0.0
    %1952 = vmatprep.subr.mxu0 0.0
    %1953 = vmatpush1.msra.mxu0 0.0
    %1954 = vmatprep.subr.mxu0 0.0
    %1955 = vmatpush1.msra.mxu0 0.0
    %1956 = vmatprep.subr.mxu0 0.0
    %1957 = vmatpush1.msra.mxu0 0.0
    %1958 = vmatprep.subr.mxu0 0.0
    %1959 = vmatpush1.msra.mxu0 0.0
    %1960 = vmatprep.subr.mxu0 0.0
    %1961 = vmatpush1.msra.mxu0 0.0
    %1962 = vmatprep.subr.mxu0 0.0
    %1963 = vmatpush1.msra.mxu0 0.0
    %1964 = vmatprep.subr.mxu0 0.0
    %1965 = vmatpush1.msra.mxu0 0.0
    %1966 = vmatprep.subr.mxu0 0.0
    %1967 = vmatpush1.msra.mxu0 0.0
    %1968 = vmatprep.subr.mxu0 0.0
    %1969 = vmatpush1.msra.mxu0 %v187
    %1970 = vmatprep.subr.mxu0 0.0
    %1971 = vmatpush2.msra.mxu0 0.0
    %1972 = vmatprep.subr.mxu0 0.0
    %1973 = vmatpush2.msra.mxu0 0.0
    %1974 = vmatprep.subr.mxu0 0.0
    %1975 = vmatpush2.msra.mxu0 0.0
    %1976 = vmatprep.subr.mxu0 0.0
    %1977 = vmatpush2.msra.mxu0 0.0
    %1978 = vmatprep.subr.mxu0 0.0
    %1979 = vmatpush2.msra.mxu0 0.0
    %1980 = vmatprep.subr.mxu0 0.0
    %1981 = vmatpush2.msra.mxu0 0.0
    %1982 = vmatprep.subr.mxu0 0.0
    %1983 = vmatpush2.msra.mxu0 0.0
    %1984 = vmatprep.subr.mxu0 0.0
    %1985 = vmatpush2.msra.mxu0 0.0
    %1986 = vmatprep.subr.mxu0 0.0
    %1987 = vmatpush2.msra.mxu0 0.0
    %1988 = vmatprep.subr.mxu0 0.0
    %1989 = vmatpush2.msra.mxu0 0.0
    %1990 = vmatprep.subr.mxu0 0.0
    %1991 = vmatpush2.msra.mxu0 0.0
    %1992 = vmatprep.subr.mxu0 0.0
    %1993 = vmatpush2.msra.mxu0 0.0
    %1994 = vmatprep.subr.mxu0 0.0
    %1995 = vmatpush2.msra.mxu0 0.0
    %1996 = vmatprep.subr.mxu0 0.0
    %1997 = vmatpush2.msra.mxu0 0.0
    %1998 = vmatprep.subr.mxu0 0.0
    %1999 = vmatpush2.msra.mxu0 0.0
    %2000 = vmatprep.subr.mxu0 0.0
    %2001 = vmatpush2.msra.mxu0 0.0
    %2002 = vmatprep.mubr.f32.mxu0 0.0
    %2003 = vmatmul.mubr.f32.gmra.mxu0 %v1936
    %v2004 = vpop.f32.mrf.mxu0
    %v2005 = vadd.f32 0.0, %v2004
    %v2006 = vpop.f32.mrf.mxu0
    %2007 = vdwg.mxu0
    %v2008 = vld [vmem:[%s14] sm:$0xff]
    %v2009 = vld [vmem:[%s14 + $0x8] sm:$0x3]
    %v2010 = vld [vmem:[#allocation13] sm:$0x1]
    %v2012 = vlaneseq
    %v2013 = vshrl.u32 %v2012, 7
    %v2014 = vsub.s32 0, %v2013
    %v2015 = vrot.slane %v2010, %v2014
    %vm2017 = vcmask 80896
    %v2019 = vsel %vm2017, %v188, 0
    %vm2021 = vcmask 1041408
    %v2023 = vsel %vm2021, %v2009, 0
    %2025 = vmatprep.subr.mxu0 0.0
    %2026 = vmatpush1.msra.mxu0 0.0
    %2027 = vmatprep.subr.mxu0 0.0
    %2028 = vmatpush1.msra.mxu0 0.0
    %2029 = vmatprep.subr.mxu0 0.0
    %2030 = vmatpush1.msra.mxu0 0.0
    %2031 = vmatprep.subr.mxu0 0.0
    %2032 = vmatpush1.msra.mxu0 0.0
    %2033 = vmatprep.subr.mxu0 0.0
    %2034 = vmatpush1.msra.mxu0 0.0
    %2035 = vmatprep.subr.mxu0 0.0
    %2036 = vmatpush1.msra.mxu0 0.0
    %2037 = vmatprep.subr.mxu0 0.0
    %2038 = vmatpush1.msra.mxu0 0.0
    %2039 = vmatprep.subr.mxu0 0.0
    %2040 = vmatpush1.msra.mxu0 0.0
    %2041 = vmatprep.subr.mxu0 0.0
    %2042 = vmatpush1.msra.mxu0 0.0
    %2043 = vmatprep.subr.mxu0 0.0
    %2044 = vmatpush1.msra.mxu0 0.0
    %2045 = vmatprep.subr.mxu0 0.0
    %2046 = vmatpush1.msra.mxu0 0.0
    %2047 = vmatprep.subr.mxu0 0.0
    %2048 = vmatpush1.msra.mxu0 0.0
    %2049 = vmatprep.subr.mxu0 0.0
    %2050 = vmatpush1.msra.mxu0 0.0
    %2051 = vmatprep.subr.mxu0 0.0
    %2052 = vmatpush1.msra.mxu0 0.0
    %2053 = vmatprep.subr.mxu0 0.0
    %2054 = vmatpush1.msra.mxu0 %v2023
    %2055 = vmatprep.subr.mxu0 0.0
    %2056 = vmatpush1.msra.mxu0 %v2008
    %2057 = vmatprep.subr.mxu0 0.0
    %2058 = vmatpush2.msra.mxu0 0.0
    %2059 = vmatprep.subr.mxu0 0.0
    %2060 = vmatpush2.msra.mxu0 0.0
    %2061 = vmatprep.subr.mxu0 0.0
    %2062 = vmatpush2.msra.mxu0 0.0
    %2063 = vmatprep.subr.mxu0 0.0
    %2064 = vmatpush2.msra.mxu0 0.0
    %2065 = vmatprep.subr.mxu0 0.0
    %2066 = vmatpush2.msra.mxu0 0.0
    %2067 = vmatprep.subr.mxu0 0.0
    %2068 = vmatpush2.msra.mxu0 0.0
    %2069 = vmatprep.subr.mxu0 0.0
    %2070 = vmatpush2.msra.mxu0 0.0
    %2071 = vmatprep.subr.mxu0 0.0
    %2072 = vmatpush2.msra.mxu0 0.0
    %2073 = vmatprep.subr.mxu0 0.0
    %2074 = vmatpush2.msra.mxu0 0.0
    %2075 = vmatprep.subr.mxu0 0.0
    %2076 = vmatpush2.msra.mxu0 0.0
    %2077 = vmatprep.subr.mxu0 0.0
    %2078 = vmatpush2.msra.mxu0 0.0
    %2079 = vmatprep.subr.mxu0 0.0
    %2080 = vmatpush2.msra.mxu0 0.0
    %2081 = vmatprep.subr.mxu0 0.0
    %2082 = vmatpush2.msra.mxu0 0.0
    %2083 = vmatprep.subr.mxu0 0.0
    %2084 = vmatpush2.msra.mxu0 0.0
    %2085 = vmatprep.subr.mxu0 0.0
    %2086 = vmatpush2.msra.mxu0 0.0
    %2087 = vmatprep.subr.mxu0 0.0
    %2088 = vmatpush2.msra.mxu0 0.0
    %2089 = vmatprep.mubr.f32.mxu0 0.0
    %2090 = vmatmul.mubr.f32.gmra.mxu0 %v2019
    %v2091 = vpop.f32.mrf.mxu0
    %v2092 = vadd.f32 %v2015, %v2091
    %v2093 = vpop.f32.mrf.mxu0
    %2094 = vdwg.mxu0
    %v2095 = vld [vmem:[%s16] sm:$0xff]
    %v2096 = vld [vmem:[%s16 + $0x8] sm:$0xff]
    %v2097 = vld [vmem:[%s16 + $0x10] sm:$0xff]
    %v2098 = vld [vmem:[%s16 + $0x18] sm:$0xff]
    %v2099 = vld [vmem:[%s17] sm:$0xff]
    %v2100 = vld [vmem:[%s17 + $0x8] sm:$0xff]
    %v2101 = vld [vmem:[%s17 + $0x10] sm:$0xff]
    %v2102 = vld [vmem:[%s17 + $0x18] sm:$0xff]
    %v2111 = vrot.slane %v1567, 7
    %vm2112 = vcmask 1041409
    %v2113 = vsel %vm2112, %v2111, %v1494
    %v2114 = vrot.slane %v1640, 6
    %vm2115 = vcmask 1042434
    %v2116 = vsel %vm2115, %v2114, %v2113
    %v2117 = vrot.slane %v1713, 5
    %vm2118 = vcmask 1043459
    %v2119 = vsel %vm2118, %v2117, %v2116
    %v2120 = vrot.slane %v1786, 4
    %vm2121 = vcmask 1044484
    %v2122 = vsel %vm2121, %v2120, %v2119
    %v2123 = vrot.slane %v1859, 3
    %vm2124 = vcmask 1045509
    %v2125 = vsel %vm2124, %v2123, %v2122
    %v2126 = vrot.slane %v1932, 2
    %vm2127 = vcmask 1046534
    %v2128 = vsel %vm2127, %v2126, %v2125
    %v2129 = vrot.slane %v2005, 1
    %vm2130 = vcmask 1047559
    %v2131 = vsel %vm2130, %v2129, %v2128
    %v2132 = vsel %vm195, %v2131, 0
    %2134 = vmatprep.subr.mxu0 0.0
    %2135 = vmatpush1.msra.mxu0 0.0
    %2136 = vmatprep.subr.mxu0 0.0
    %2137 = vmatpush1.msra.mxu0 0.0
    %2138 = vmatprep.subr.mxu0 0.0
    %2139 = vmatpush1.msra.mxu0 0.0
    %2140 = vmatprep.subr.mxu0 0.0
    %2141 = vmatpush1.msra.mxu0 0.0
    %2142 = vmatprep.subr.mxu0 0.0
    %2143 = vmatpush1.msra.mxu0 0.0
    %2144 = vmatprep.subr.mxu0 0.0
    %2145 = vmatpush1.msra.mxu0 0.0
    %2146 = vmatprep.subr.mxu0 0.0
    %2147 = vmatpush1.msra.mxu0 0.0
    %2148 = vmatprep.subr.mxu0 0.0
    %2149 = vmatpush1.msra.mxu0 0.0
    %2150 = vmatprep.subr.mxu0 0.0
    %2151 = vmatpush1.msra.mxu0 0.0
    %2152 = vmatprep.subr.mxu0 0.0
    %2153 = vmatpush1.msra.mxu0 0.0
    %2154 = vmatprep.subr.mxu0 0.0
    %2155 = vmatpush1.msra.mxu0 0.0
    %2156 = vmatprep.subr.mxu0 0.0
    %2157 = vmatpush1.msra.mxu0 0.0
    %2158 = vmatprep.subr.mxu0 0.0
    %2159 = vmatpush1.msra.mxu0 %v2102
    %2160 = vmatprep.subr.mxu0 0.0
    %2161 = vmatpush1.msra.mxu0 %v2101
    %2162 = vmatprep.subr.mxu0 0.0
    %2163 = vmatpush1.msra.mxu0 %v2100
    %2164 = vmatprep.subr.mxu0 0.0
    %2165 = vmatpush1.msra.mxu0 %v2099
    %2166 = vmatprep.subr.mxu0 0.0
    %2167 = vmatpush2.msra.mxu0 0.0
    %2168 = vmatprep.subr.mxu0 0.0
    %2169 = vmatpush2.msra.mxu0 0.0
    %2170 = vmatprep.subr.mxu0 0.0
    %2171 = vmatpush2.msra.mxu0 0.0
    %2172 = vmatprep.subr.mxu0 0.0
    %2173 = vmatpush2.msra.mxu0 0.0
    %2174 = vmatprep.subr.mxu0 0.0
    %2175 = vmatpush2.msra.mxu0 0.0
    %2176 = vmatprep.subr.mxu0 0.0
    %2177 = vmatpush2.msra.mxu0 0.0
    %2178 = vmatprep.subr.mxu0 0.0
    %2179 = vmatpush2.msra.mxu0 0.0
    %2180 = vmatprep.subr.mxu0 0.0
    %2181 = vmatpush2.msra.mxu0 0.0
    %2182 = vmatprep.subr.mxu0 0.0
    %2183 = vmatpush2.msra.mxu0 0.0
    %2184 = vmatprep.subr.mxu0 0.0
    %2185 = vmatpush2.msra.mxu0 0.0
    %2186 = vmatprep.subr.mxu0 0.0
    %2187 = vmatpush2.msra.mxu0 0.0
    %2188 = vmatprep.subr.mxu0 0.0
    %2189 = vmatpush2.msra.mxu0 0.0
    %2190 = vmatprep.subr.mxu0 0.0
    %2191 = vmatpush2.msra.mxu0 0.0
    %2192 = vmatprep.subr.mxu0 0.0
    %2193 = vmatpush2.msra.mxu0 0.0
    %2194 = vmatprep.subr.mxu0 0.0
    %2195 = vmatpush2.msra.mxu0 0.0
    %2196 = vmatprep.subr.mxu0 0.0
    %2197 = vmatpush2.msra.mxu0 0.0
    %2198 = vmatprep.mubr.f32.mxu0 0.0
    %2199 = vmatmul.mubr.f32.gmra.mxu0 %v2132
    %v2200 = vpop.f32.mrf.mxu0
    %v2201 = vadd.f32 0.0, %v2200
    %v2202 = vpop.f32.mrf.mxu0
    %2203 = vdwg.mxu0
    %v2204 = vsel %vm195, %v683, 0
    %2206 = vmatprep.subr.mxu0 0.0
    %2207 = vmatpush1.msra.mxu0 0.0
    %2208 = vmatprep.subr.mxu0 0.0
    %2209 = vmatpush1.msra.mxu0 0.0
    %2210 = vmatprep.subr.mxu0 0.0
    %2211 = vmatpush1.msra.mxu0 0.0
    %2212 = vmatprep.subr.mxu0 0.0
    %2213 = vmatpush1.msra.mxu0 0.0
    %2214 = vmatprep.subr.mxu0 0.0
    %2215 = vmatpush1.msra.mxu0 0.0
    %2216 = vmatprep.subr.mxu0 0.0
    %2217 = vmatpush1.msra.mxu0 0.0
    %2218 = vmatprep.subr.mxu0 0.0
    %2219 = vmatpush1.msra.mxu0 0.0
    %2220 = vmatprep.subr.mxu0 0.0
    %2221 = vmatpush1.msra.mxu0 0.0
    %2222 = vmatprep.subr.mxu0 0.0
    %2223 = vmatpush1.msra.mxu0 0.0
    %2224 = vmatprep.subr.mxu0 0.0
    %2225 = vmatpush1.msra.mxu0 0.0
    %2226 = vmatprep.subr.mxu0 0.0
    %2227 = vmatpush1.msra.mxu0 0.0
    %2228 = vmatprep.subr.mxu0 0.0
    %2229 = vmatpush1.msra.mxu0 0.0
    %2230 = vmatprep.subr.mxu0 0.0
    %2231 = vmatpush1.msra.mxu0 %v2098
    %2232 = vmatprep.subr.mxu0 0.0
    %2233 = vmatpush1.msra.mxu0 %v2097
    %2234 = vmatprep.subr.mxu0 0.0
    %2235 = vmatpush1.msra.mxu0 %v2096
    %2236 = vmatprep.subr.mxu0 0.0
    %2237 = vmatpush1.msra.mxu0 %v2095
    %2238 = vmatprep.subr.mxu0 0.0
    %2239 = vmatpush2.msra.mxu0 0.0
    %2240 = vmatprep.subr.mxu0 0.0
    %2241 = vmatpush2.msra.mxu0 0.0
    %2242 = vmatprep.subr.mxu0 0.0
    %2243 = vmatpush2.msra.mxu0 0.0
    %2244 = vmatprep.subr.mxu0 0.0
    %2245 = vmatpush2.msra.mxu0 0.0
    %2246 = vmatprep.subr.mxu0 0.0
    %2247 = vmatpush2.msra.mxu0 0.0
    %2248 = vmatprep.subr.mxu0 0.0
    %2249 = vmatpush2.msra.mxu0 0.0
    %2250 = vmatprep.subr.mxu0 0.0
    %2251 = vmatpush2.msra.mxu0 0.0
    %2252 = vmatprep.subr.mxu0 0.0
    %2253 = vmatpush2.msra.mxu0 0.0
    %2254 = vmatprep.subr.mxu0 0.0
    %2255 = vmatpush2.msra.mxu0 0.0
    %2256 = vmatprep.subr.mxu0 0.0
    %2257 = vmatpush2.msra.mxu0 0.0
    %2258 = vmatprep.subr.mxu0 0.0
    %2259 = vmatpush2.msra.mxu0 0.0
    %2260 = vmatprep.subr.mxu0 0.0
    %2261 = vmatpush2.msra.mxu0 0.0
    %2262 = vmatprep.subr.mxu0 0.0
    %2263 = vmatpush2.msra.mxu0 0.0
    %2264 = vmatprep.subr.mxu0 0.0
    %2265 = vmatpush2.msra.mxu0 0.0
    %2266 = vmatprep.subr.mxu0 0.0
    %2267 = vmatpush2.msra.mxu0 0.0
    %2268 = vmatprep.subr.mxu0 0.0
    %2269 = vmatpush2.msra.mxu0 0.0
    %2270 = vmatprep.mubr.f32.mxu0 0.0
    %2271 = vmatmul.mubr.f32.gmra.mxu0 %v2204
    %v2272 = vpop.f32.mrf.mxu0
    %v2273 = vadd.f32 %v2201, %v2272
    %v2274 = vpop.f32.mrf.mxu0
    %2275 = vdwg.mxu0
    %v2276 = vld [vmem:[%s18] sm:$0xff]
    %v2277 = vld [vmem:[%s18 + $0x8] sm:$0xff]
    %v2278 = vld [vmem:[%s18 + $0x10] sm:$0xff]
    %v2279 = vld [vmem:[%s18 + $0x18] sm:$0xff]
    %v2281 = vsel %vm195, %v2092, 0
    %2283 = vmatprep.subr.mxu0 0.0
    %2284 = vmatpush1.msra.mxu0 0.0
    %2285 = vmatprep.subr.mxu0 0.0
    %2286 = vmatpush1.msra.mxu0 0.0
    %2287 = vmatprep.subr.mxu0 0.0
    %2288 = vmatpush1.msra.mxu0 0.0
    %2289 = vmatprep.subr.mxu0 0.0
    %2290 = vmatpush1.msra.mxu0 0.0
    %2291 = vmatprep.subr.mxu0 0.0
    %2292 = vmatpush1.msra.mxu0 0.0
    %2293 = vmatprep.subr.mxu0 0.0
    %2294 = vmatpush1.msra.mxu0 0.0
    %2295 = vmatprep.subr.mxu0 0.0
    %2296 = vmatpush1.msra.mxu0 0.0
    %2297 = vmatprep.subr.mxu0 0.0
    %2298 = vmatpush1.msra.mxu0 0.0
    %2299 = vmatprep.subr.mxu0 0.0
    %2300 = vmatpush1.msra.mxu0 0.0
    %2301 = vmatprep.subr.mxu0 0.0
    %2302 = vmatpush1.msra.mxu0 0.0
    %2303 = vmatprep.subr.mxu0 0.0
    %2304 = vmatpush1.msra.mxu0 0.0
    %2305 = vmatprep.subr.mxu0 0.0
    %2306 = vmatpush1.msra.mxu0 0.0
    %2307 = vmatprep.subr.mxu0 0.0
    %2308 = vmatpush1.msra.mxu0 %v2279
    %2309 = vmatprep.subr.mxu0 0.0
    %2310 = vmatpush1.msra.mxu0 %v2278
    %2311 = vmatprep.subr.mxu0 0.0
    %2312 = vmatpush1.msra.mxu0 %v2277
    %2313 = vmatprep.subr.mxu0 0.0
    %2314 = vmatpush1.msra.mxu0 %v2276
    %2315 = vmatprep.subr.mxu0 0.0
    %2316 = vmatpush2.msra.mxu0 0.0
    %2317 = vmatprep.subr.mxu0 0.0
    %2318 = vmatpush2.msra.mxu0 0.0
    %2319 = vmatprep.subr.mxu0 0.0
    %2320 = vmatpush2.msra.mxu0 0.0
    %2321 = vmatprep.subr.mxu0 0.0
    %2322 = vmatpush2.msra.mxu0 0.0
    %2323 = vmatprep.subr.mxu0 0.0
    %2324 = vmatpush2.msra.mxu0 0.0
    %2325 = vmatprep.subr.mxu0 0.0
    %2326 = vmatpush2.msra.mxu0 0.0
    %2327 = vmatprep.subr.mxu0 0.0
    %2328 = vmatpush2.msra.mxu0 0.0
    %2329 = vmatprep.subr.mxu0 0.0
    %2330 = vmatpush2.msra.mxu0 0.0
    %2331 = vmatprep.subr.mxu0 0.0
    %2332 = vmatpush2.msra.mxu0 0.0
    %2333 = vmatprep.subr.mxu0 0.0
    %2334 = vmatpush2.msra.mxu0 0.0
    %2335 = vmatprep.subr.mxu0 0.0
    %2336 = vmatpush2.msra.mxu0 0.0
    %2337 = vmatprep.subr.mxu0 0.0
    %2338 = vmatpush2.msra.mxu0 0.0
    %2339 = vmatprep.subr.mxu0 0.0
    %2340 = vmatpush2.msra.mxu0 0.0
    %2341 = vmatprep.subr.mxu0 0.0
    %2342 = vmatpush2.msra.mxu0 0.0
    %2343 = vmatprep.subr.mxu0 0.0
    %2344 = vmatpush2.msra.mxu0 0.0
    %2345 = vmatprep.subr.mxu0 0.0
    %2346 = vmatpush2.msra.mxu0 0.0
    %2347 = vmatprep.mubr.f32.mxu0 0.0
    %2348 = vmatmul.mubr.f32.gmra.mxu0 %v2281
    %v2349 = vpop.f32.mrf.mxu0
    %v2350 = vadd.f32 0.0, %v2349
    %v2351 = vpop.f32.mrf.mxu0
    %2352 = vdwg.mxu0
    %v2353 = vadd.f32 %v2273, %v2350
    %v2354 = vld [vmem:[#allocation15] sm:$0x1]
    %v2356 = vlaneseq
    %v2357 = vshrl.u32 %v2356, 7
    %v2358 = vsub.s32 0, %v2357
    %v2359 = vrot.slane %v2354, %v2358
    %v2361 = vadd.f32 %v2353, %v2359
    %v2362 = vtanh.pop %v2361
    %v2363 = vpack.c.bf16 %v2362, %v2362
    %vm2364 = vcmask 257024
    %2365 = vst.msk [vmem:[%s20] sm:$0xf] %vm2364, %v2363
    %2366 = vst.msk [vmem:[%s21] sm:$0xff] %vm195, %v683
    %2367 = vst.msk [vmem:[%s22] sm:$0x1] %vm1334, %v1408
    %2368 = vst.msk [vmem:[%s22 + $0x1] sm:$0x1] %vm1334, %v1410
    %2369 = vst.msk [vmem:[%s22 + $0x2] sm:$0x1] %vm1334, %v1412
    %2370 = vst.msk [vmem:[%s22 + $0x3] sm:$0x1] %vm1334, %v1414
    %2371 = vst.msk [vmem:[%s22 + $0x4] sm:$0x1] %vm1334, %v1416
    %2372 = vst.msk [vmem:[%s22 + $0x5] sm:$0x1] %vm1334, %v1418
    %2373 = vst.msk [vmem:[%s22 + $0x6] sm:$0x1] %vm1334, %v1420
    %2374 = vst.msk [vmem:[%s22 + $0x7] sm:$0x1] %vm1334, %v1422
    // Predicated region
    $region118: #{attn_decoder_forward.2} parent=1 // pred_check
      _
    $region119: #{attn_decoder_forward.2} parent=1 // pred_check_branch
      %2376 = sbr.rel (0) target = $region121
    $region120: #{attn_decoder_forward.2} parent=1 // pred_region
      _
    $region121: #{attn_decoder_forward.2} parent=1 // pred_fallthru
      _
    // Predicated region
    $region122: #{attn_decoder_forward.2} parent=1 // pred_check
      _
    $region123: #{attn_decoder_forward.2} parent=1 // pred_check_branch
      %2378 = sbr.rel (0) target = $region125
    $region124: #{attn_decoder_forward.2} parent=1 // pred_region
      _
    $region125: #{attn_decoder_forward.2} parent=1 // pred_fallthru
      _
    // Predicated region
    $region126: #{attn_decoder_forward.2} parent=1 // pred_check
      _
    $region127: #{attn_decoder_forward.2} parent=1 // pred_check_branch
      %2380 = sbr.rel (0) target = $region129
    $region128: #{attn_decoder_forward.2} parent=1 // pred_region
      _
    $region129: #{attn_decoder_forward.2} parent=1 // pred_fallthru
      _
    // Predicated region
    $region130: #{attn_decoder_forward.2} parent=1 // pred_check
      _
    $region131: #{attn_decoder_forward.2} parent=1 // pred_check_branch
      %2382 = sbr.rel (0) target = $region133
    $region132: #{attn_decoder_forward.2} parent=1 // pred_region
      _
    $region133: #{attn_decoder_forward.2} parent=1 // pred_fallthru
      _
    // Predicated region
    $region134: #{attn_decoder_forward.2} parent=1 // pred_check
      _
    $region135: #{attn_decoder_forward.2} parent=1 // pred_check_branch
      %2384 = sbr.rel (0) target = $region137
    $region136: #{attn_decoder_forward.2} parent=1 // pred_region
      _
    $region137: #{attn_decoder_forward.2} parent=1 // pred_fallthru
      _
    // Predicated region
    $region138: #{attn_decoder_forward.2} parent=1 // pred_check
      _
    $region139: #{attn_decoder_forward.2} parent=1 // pred_check_branch
      %2386 = sbr.rel (0) target = $region141
    $region140: #{attn_decoder_forward.2} parent=1 // pred_region
      _
    $region141: #{attn_decoder_forward.2} parent=1 // pred_fallthru
      _
    %2387 = vsyncpa [#allocation3], 1
    %2388 = vsyncpa [#allocation5], 1
    %2389 = vsyncpa [#allocation8], 1
    %2390 = vsyncpa [#allocation11], 1
    %2391 = vsyncpa [#allocation14], 1

</llo_original>
